<compile_context>
chip_gen: v7x
topology: tpu7x:2x2x1
jax: 0.10.0
libtpu: 0.0.40
codegen_flags: <defaults>
</compile_context>

<pallas_src>
import functools

import jax
import jax.numpy as jnp
from jax import lax
from jax.experimental import pallas as pl
from jax.experimental.pallas import tpu as pltpu


def _adown_kernel(x_ref, w1_ref, b1_ref, w2_ref, b2_ref, scol_ref, sev_ref,
                  out_ref, g_scr, *, mxu_dtype, ew_dtype):
    # x_ref   : (1, C, H, W)      VMEM  one image, NCHW
    # w1_ref  : (9, CO, CH)       VMEM  BN-folded 3x3 conv weights, tap = kh*3 + kw
    # b1_ref  : (CO, 1)           VMEM  folded bias (conv1)
    # w2_ref  : (CO, CH)          VMEM  BN-folded 1x1 conv weights
    # b2_ref  : (CO, 1)           VMEM  folded bias (conv2)
    # scol_ref: (3, WA, OW)       VMEM  one-hot column-tap selection, per kw (mxu_dtype)
    # sev_ref : (WA, OW)          VMEM  one-hot even-column selection (f32, exact)
    # out_ref : (1, 2*CO, M)      VMEM  lane-dense output slab, M = OH*OW
    # g_scr   : (CH, HAp+8, OW)   VMEM  f32 scratch (8 zero top-margin rows for padding)
    _, C, H, W = x_ref.shape
    CO, CH = w2_ref.shape
    HA, WA = H - 1, W - 1                 # spatial size after 2x2 / stride-1 avg pool
    OW = sev_ref.shape[1]
    OH = (HA - 1) // 2 + 1                # k=3, s=2, p=1
    M = OH * OW
    HAp = g_scr.shape[1] - 8              # avg-pool rows padded up to a multiple of 8
    f32 = jnp.float32
    NEG = -1e30                           # finite max-pool padding sentinel

    # ---- 2x2 / stride-1 avg pool (VPU), rows zero-padded HA -> HAp ----
    xe = x_ref[0].astype(ew_dtype)        # (C, H, W)
    t = 0.25 * (xe[:, :HA, :WA] + xe[:, 1:, :WA]
                + xe[:, :HA, 1:] + xe[:, 1:, 1:])          # (C, HA, WA)
    if HAp != HA:
        t = jnp.concatenate(
            [t, jnp.zeros((C, HAp - HA, WA), ew_dtype)], axis=1)   # (C, HAp, WA)

    # Top margin of the gather scratch reads as zero padding (kh=0, p=0 tap row).
    g_scr[:, 0:8, :] = jnp.zeros((CH, 8, OW), f32)

    # ---------- branch 1: 3x3 s2 p1 conv (BN folded) + SiLU ----------
    # Columns: one folded one-hot matmul per kw.  Rows: stride-2 sublane loads
    # from the zero-margined scratch.  Conv: 9 accumulation matmuls, no im2col.
    tam = t[:CH].reshape(CH * HAp, WA).astype(mxu_dtype)
    acc = jnp.zeros((CO, M), f32)
    for kw in range(3):
        u = jnp.dot(tam, scol_ref[kw], preferred_element_type=f32)   # (CH*HAp, OW)
        g_scr[:, 8:8 + HAp, :] = u.reshape(CH, HAp, OW)
        for kh in range(3):
            # scratch row 8 + (2p + kh - 1); row 7 and zero-padded tail rows give
            # the conv zero padding at the top/bottom edges.
            tap = g_scr[:, pl.ds(7 + kh, OH, 2), :]                  # (CH, OH, OW)
            acc = acc + jnp.dot(w1_ref[3 * kh + kw],
                                tap.reshape(CH, M).astype(mxu_dtype),
                                preferred_element_type=f32)
    z1 = acc + b1_ref[...]                                           # (CO, M)
    out_ref[0, :CO, :] = (
        z1 * pl.reciprocal(1.0 + jnp.exp(-z1), approx=True)).astype(out_ref.dtype)

    # ---------- branch 2: 3x3 s2 p1 max pool + 1x1 conv (BN folded) + SiLU ----------
    tb = t[CH:]                                                       # (CH, HAp, WA)
    ncol = jnp.full((CH, HAp, 1), NEG, ew_dtype)
    cmax = jnp.maximum(
        tb,
        jnp.maximum(jnp.concatenate([tb[:, :, 1:], ncol], axis=2),    # w + 1
                    jnp.concatenate([ncol, tb[:, :, :WA - 1]], axis=2)))  # w - 1
    nrow = jnp.full((CH, 1, WA), NEG, ew_dtype)
    up = jnp.concatenate([cmax[:, 1:, :], nrow], axis=1)              # h + 1
    dn = jnp.concatenate([nrow, cmax[:, :HAp - 1, :]], axis=1)        # h - 1
    ridx = lax.broadcasted_iota(jnp.int32, (1, HAp, 1), 1)
    up = jnp.where(ridx < HA - 1, up, NEG)                            # h+1 >= HA -> pad
    wmax = jnp.maximum(cmax, jnp.maximum(up, dn))                     # 3x3 window max
    # Exact even-column subsample (f32 one-hot matmul), then even-row strided load.
    mc = jnp.dot(wmax.reshape(CH * HAp, WA).astype(f32), sev_ref[...],
                 preferred_element_type=f32)                          # (CH*HAp, OW)
    g_scr[:, 8:8 + HAp, :] = mc.reshape(CH, HAp, OW)
    mx = g_scr[:, pl.ds(8, OH, 2), :]                                 # (CH, OH, OW)
    z2 = jnp.dot(w2_ref[...], mx.reshape(CH, M).astype(mxu_dtype),
                 preferred_element_type=f32) + b2_ref[...]            # (CO, M)
    out_ref[0, CO:, :] = (
        z2 * pl.reciprocal(1.0 + jnp.exp(-z2), approx=True)).astype(out_ref.dtype)


def adown_pallas(x, w1, b1, w2, b2, *, mxu_dtype=jnp.bfloat16,
                 ew_dtype=jnp.float32, vmem_limit_bytes=None):
    """ADown forward (inference-mode BN folded into the convolutions).

    x      : (N, C, H, W) NCHW, f32 or bf16 (bf16 halves input/output HBM bytes — v5e).
    w1     : (CO, C//2, 3, 3)  BN-folded 3x3 conv weights.
    w2     : (CO, C//2, 1, 1)  (or (CO, C//2)) BN-folded 1x1 conv weights.
    b1, b2 : (CO,)             folded biases.
    mxu_dtype : MXU operand dtype (bf16 default; f32 for strict numerics).
    ew_dtype  : elementwise dtype (keep f32 on v5e; bf16 is fine on v6e/v7x).
    vmem_limit_bytes : raise the scoped VMEM limit for large feature maps (e.g. ~100 MiB
                       on v6e); on v7x prefer an H-band grid split (see TODO in kernel).
    Returns (N, 2*CO, OH, OW) NCHW in x.dtype.
    """
    N, C, H, W = x.shape
    CH = C // 2
    CO = w1.shape[0]
    assert w1.shape == (CO, CH, 3, 3), w1.shape
    w2m = jnp.reshape(jnp.asarray(w2), (CO, CH))
    HA, WA = H - 1, W - 1
    OH = (HA - 1) // 2 + 1
    OW = (WA - 1) // 2 + 1
    M = OH * OW
    HAp = ((HA + 7) // 8) * 8

    # Host-side constant layouts (DMA'd once, constant index_map).
    w1t = jnp.transpose(jnp.asarray(w1), (2, 3, 0, 1)).reshape(9, CO, CH).astype(mxu_dtype)
    w2t = w2m.astype(mxu_dtype)
    b1c = jnp.asarray(b1, jnp.float32).reshape(CO, 1)
    b2c = jnp.asarray(b2, jnp.float32).reshape(CO, 1)
    w_i = jnp.arange(WA, dtype=jnp.int32)[:, None]
    q_i = jnp.arange(OW, dtype=jnp.int32)[None, :]
    # scol[kw, w, q] = 1 iff w == 2q + kw - 1 (out-of-range taps -> all-zero column).
    scol = jnp.stack([(w_i == 2 * q_i + kw - 1) for kw in range(3)],
                     axis=0).astype(mxu_dtype)
    sev = (w_i == 2 * q_i).astype(jnp.float32)            # even-column selection

    cparams = dict(dimension_semantics=("parallel",))
    if vmem_limit_bytes is not None:
        cparams["vmem_limit_bytes"] = int(vmem_limit_bytes)

    out = pl.pallas_call(
        functools.partial(_adown_kernel, mxu_dtype=mxu_dtype, ew_dtype=ew_dtype),
        out_shape=jax.ShapeDtypeStruct((N, 2 * CO, M), x.dtype),
        grid=(N,),
        in_specs=[
            pl.BlockSpec((1, C, H, W), lambda n: (n, 0, 0, 0)),
            pl.BlockSpec((9, CO, CH), lambda n: (0, 0, 0)),
            pl.BlockSpec((CO, 1), lambda n: (0, 0)),
            pl.BlockSpec((CO, CH), lambda n: (0, 0)),
            pl.BlockSpec((CO, 1), lambda n: (0, 0)),
            pl.BlockSpec((3, WA, OW), lambda n: (0, 0, 0)),
            pl.BlockSpec((WA, OW), lambda n: (0, 0)),
        ],
        out_specs=pl.BlockSpec((1, 2 * CO, M), lambda n: (n, 0, 0)),
        scratch_shapes=[pltpu.VMEM((CH, HAp + 8, OW), jnp.float32)],
        compiler_params=pltpu.CompilerParams(**cparams),
    )(x, w1t, b1c, w2t, b2c, scol, sev)
    # Free metadata reshape back to NCHW.
    return out.reshape(N, 2 * CO, OH, OW)


if __name__ == "__main__":
    key = jax.random.PRNGKey(0)
    (kx, kw1, kw2, kg1, kb1, km1, kv1, kg2, kb2, km2, kv2) = jax.random.split(key, 11)

    N, C_in, H, W = 4, 4, 16, 16
    C_out = 8
    ch, co = C_in // 2, C_out // 2
    eps = 1e-5

    x = jax.random.normal(kx, (N, C_in, H, W), jnp.float32)

    # PyTorch-style parameters: Conv2d OIHW weights + BatchNorm (eval) statistics.
    conv1_w = 0.3 * jax.random.normal(kw1, (co, ch, 3, 3), jnp.float32)
    conv2_w = 0.3 * jax.random.normal(kw2, (co, ch, 1, 1), jnp.float32)
    g1 = 1.0 + 0.1 * jax.random.normal(kg1, (co,), jnp.float32)
    be1 = 0.1 * jax.random.normal(kb1, (co,), jnp.float32)
    m1 = 0.1 * jax.random.normal(km1, (co,), jnp.float32)
    v1 = 1.0 + 0.1 * jnp.abs(jax.random.normal(kv1, (co,), jnp.float32))
    g2 = 1.0 + 0.1 * jax.random.normal(kg2, (co,), jnp.float32)
    be2 = 0.1 * jax.random.normal(kb2, (co,), jnp.float32)
    m2 = 0.1 * jax.random.normal(km2, (co,), jnp.float32)
    v2 = 1.0 + 0.1 * jnp.abs(jax.random.normal(kv2, (co,), jnp.float32))

    # Fold BatchNorm (inference mode) into the convolutions.
    s1 = g1 / jnp.sqrt(v1 + eps)
    b1 = be1 - m1 * s1
    s2 = g2 / jnp.sqrt(v2 + eps)
    b2 = be2 - m2 * s2
    w1f = conv1_w * s1[:, None, None, None]        # (co, ch, 3, 3)
    w2f = conv2_w * s2[:, None, None, None]        # (co, ch, 1, 1)

    # Pure-JAX reference with the same folded parameters.
    t = 0.25 * (x[:, :, :-1, :-1] + x[:, :, 1:, :-1] + x[:, :, :-1, 1:] + x[:, :, 1:, 1:])
    x1, x2 = t[:, :ch], t[:, ch:]
    y1 = lax.conv_general_dilated(x1, w1f, (2, 2), ((1, 1), (1, 1)),
                                  dimension_numbers=("NCHW", "OIHW", "NCHW"))
    y1 = y1 + b1[None, :, None, None]
    y1 = y1 * jax.nn.sigmoid(y1)
    x2p = jnp.pad(x2, ((0, 0), (0, 0), (1, 1), (1, 1)), constant_values=-jnp.inf)
    y2 = lax.reduce_window(x2p, -jnp.inf, lax.max, (1, 1, 3, 3), (1, 1, 2, 2), "VALID")
    y2 = lax.conv_general_dilated(y2, w2f, (1, 1), "VALID",
                                  dimension_numbers=("NCHW", "OIHW", "NCHW"))
    y2 = y2 + b2[None, :, None, None]
    y2 = y2 * jax.nn.sigmoid(y2)
    ref = jnp.concatenate([y1, y2], axis=1)

    # f32 MXU-operand path (approx EUP reciprocal in SiLU -> modest tolerance).
    out32 = jax.block_until_ready(
        adown_pallas(x, w1f, b1, w2f, b2, mxu_dtype=jnp.float32))
    assert out32.shape == (N, C_out, 8, 8), out32.shape
    if not jnp.allclose(out32, ref, atol=1e-2, rtol=1e-2):
        raise AssertionError(
            f"f32 mismatch, max abs err = {jnp.max(jnp.abs(out32 - ref))}")

    # bf16 MXU-operand path (default): loose check.
    outbf = jax.block_until_ready(
        adown_pallas(x, w1f, b1, w2f, b2, mxu_dtype=jnp.bfloat16))
    if not jnp.allclose(outbf, ref, atol=6e-2, rtol=6e-2):
        raise AssertionError(
            f"bf16 mismatch, max abs err = {jnp.max(jnp.abs(outbf - ref))}")

    # bf16 elementwise path (v6e/v7x knob): loosest check.
    outew = jax.block_until_ready(
        adown_pallas(x, w1f, b1, w2f, b2,
                     mxu_dtype=jnp.bfloat16, ew_dtype=jnp.bfloat16))
    if not jnp.allclose(outew, ref, atol=1e-1, rtol=1e-1):
        raise AssertionError(
            f"bf16-ew mismatch, max abs err = {jnp.max(jnp.abs(outew - ref))}")

    print("KERNEL_OK")
</pallas_src>

<mosaic_0001>
module attributes {stable_mosaic.version = 11 : i64} {
  func.func @_adown_kernel(%arg0: i32, %arg1: memref<1x4x16x16xf32, #tpu.memory_space<vmem>>, %arg2: memref<9x4x2xf32, #tpu.memory_space<vmem>>, %arg3: memref<4x1xf32, #tpu.memory_space<vmem>>, %arg4: memref<4x2xf32, #tpu.memory_space<vmem>>, %arg5: memref<4x1xf32, #tpu.memory_space<vmem>>, %arg6: memref<3x15x8xf32, #tpu.memory_space<vmem>>, %arg7: memref<15x8xf32, #tpu.memory_space<vmem>>, %arg8: memref<1x8x64xf32, #tpu.memory_space<vmem>>, %arg9: memref<2x24x8xf32, #tpu.memory_space<vmem>>) attributes {dimension_semantics = [#tpu.dimension_semantics<parallel>], iteration_bounds = array<i64: 4>, scalar_prefetch = 0 : i64, scratch_operands = 1 : i64, tpu.core_type = #tpu.core_type<tc>, window_params = [{transform_indices = @transform_0, window_bounds = array<i64: 1, 4, 16, 16>}, {pipeline_mode = #tpu.pipeline_mode<synchronous>, transform_indices = @transform_1, window_bounds = array<i64: 9, 4, 2>}, {pipeline_mode = #tpu.pipeline_mode<synchronous>, transform_indices = @transform_2, window_bounds = array<i64: 4, 1>}, {pipeline_mode = #tpu.pipeline_mode<synchronous>, transform_indices = @transform_3, window_bounds = array<i64: 4, 2>}, {pipeline_mode = #tpu.pipeline_mode<synchronous>, transform_indices = @transform_4, window_bounds = array<i64: 4, 1>}, {pipeline_mode = #tpu.pipeline_mode<synchronous>, transform_indices = @transform_5, window_bounds = array<i64: 3, 15, 8>}, {pipeline_mode = #tpu.pipeline_mode<synchronous>, transform_indices = @transform_6, window_bounds = array<i64: 15, 8>}, {transform_indices = @transform_7, window_bounds = array<i64: 1, 8, 64>}]} {
    %c0 = arith.constant 0 : index
    %c0_0 = arith.constant 0 : index
    %c0_1 = arith.constant 0 : index
    %c0_2 = arith.constant 0 : index
    %0 = vector.load %arg1[%c0, %c0_0, %c0_1, %c0_2] : memref<1x4x16x16xf32, #tpu.memory_space<vmem>>, vector<1x4x16x16xf32>
    %1 = vector.shape_cast %0 : vector<1x4x16x16xf32> to vector<4x16x16xf32>
    %2 = vector.extract_strided_slice %1 {offsets = [0, 0, 0], sizes = [4, 15, 15], strides = [1, 1, 1]} : vector<4x16x16xf32> to vector<4x15x15xf32>
    %3 = vector.extract_strided_slice %1 {offsets = [0, 1, 0], sizes = [4, 15, 15], strides = [1, 1, 1]} : vector<4x16x16xf32> to vector<4x15x15xf32>
    %4 = arith.addf %2, %3 : vector<4x15x15xf32>
    %5 = vector.extract_strided_slice %1 {offsets = [0, 0, 1], sizes = [4, 15, 15], strides = [1, 1, 1]} : vector<4x16x16xf32> to vector<4x15x15xf32>
    %6 = arith.addf %4, %5 : vector<4x15x15xf32>
    %7 = vector.extract_strided_slice %1 {offsets = [0, 1, 1], sizes = [4, 15, 15], strides = [1, 1, 1]} : vector<4x16x16xf32> to vector<4x15x15xf32>
    %8 = arith.addf %6, %7 : vector<4x15x15xf32>
    %cst = arith.constant 2.500000e-01 : f32
    %9 = vector.broadcast %cst : f32 to vector<4x15x15xf32>
    %10 = arith.mulf %9, %8 : vector<4x15x15xf32>
    %cst_3 = arith.constant 0.000000e+00 : f32
    %11 = vector.broadcast %cst_3 : f32 to vector<4x1x15xf32>
    %12 = tpu.concatenate %10, %11 in 1 : vector<4x15x15xf32>, vector<4x1x15xf32> -> vector<4x16x15xf32>
    %cst_4 = arith.constant 0.000000e+00 : f32
    %13 = vector.broadcast %cst_4 : f32 to vector<2x8x8xf32>
    %c0_5 = arith.constant 0 : index
    %c0_6 = arith.constant 0 : index
    %c0_7 = arith.constant 0 : index
    %14 = vector.load %arg9[%c0_5, %c0_6, %c0_7] : memref<2x24x8xf32, #tpu.memory_space<vmem>>, vector<2x8x8xf32>
    tpu.vector_store %arg9[%c0_5, %c0_6, %c0_7], %13 {strides = array<i32>} : memref<2x24x8xf32, #tpu.memory_space<vmem>>, vector<2x8x8xf32>,
    %15 = vector.extract_strided_slice %12 {offsets = [0, 0, 0], sizes = [2, 16, 15], strides = [1, 1, 1]} : vector<4x16x15xf32> to vector<2x16x15xf32>
    %16 = vector.shape_cast %15 : vector<2x16x15xf32> to vector<32x15xf32>
    %cst_8 = arith.constant 0.000000e+00 : f32
    %17 = vector.broadcast %cst_8 : f32 to vector<4x64xf32>
    %c0_9 = arith.constant 0 : index
    %c0_10 = arith.constant 0 : index
    %c0_11 = arith.constant 0 : index
    %18 = vector.load %arg6[%c0_9, %c0_10, %c0_11] : memref<3x15x8xf32, #tpu.memory_space<vmem>>, vector<1x15x8xf32>
    %19 = vector.shape_cast %18 : vector<1x15x8xf32> to vector<15x8xf32>
    %cst_12 = arith.constant dense<0.000000e+00> : vector<32x8xf32>
    %20 = tpu.matmul %16, %19, %cst_12 {dimension_numbers = #tpu.dot_dimension_numbers<[1], [0], [0], [1], [0, 0, 1, 1], [], []>} : vector<32x15xf32>, vector<15x8xf32>, vector<32x8xf32> -> vector<32x8xf32>
    %21 = vector.shape_cast %20 : vector<32x8xf32> to vector<2x16x8xf32>
    %c0_13 = arith.constant 0 : index
    %c8 = arith.constant 8 : index
    %c0_14 = arith.constant 0 : index
    %22 = vector.load %arg9[%c0_13, %c8, %c0_14] : memref<2x24x8xf32, #tpu.memory_space<vmem>>, vector<2x16x8xf32>
    tpu.vector_store %arg9[%c0_13, %c8, %c0_14], %21 {strides = array<i32>} : memref<2x24x8xf32, #tpu.memory_space<vmem>>, vector<2x16x8xf32>,
    %c0_15 = arith.constant 0 : index
    %c7 = arith.constant 7 : index
    %c0_16 = arith.constant 0 : index
    %23 = tpu.strided_load %arg9[%c0_15, %c7, %c0_16] {strides = array<i32: 1, 2, 1>} : memref<2x24x8xf32, #tpu.memory_space<vmem>>, vector<2x8x8xf32>
    %c0_17 = arith.constant 0 : index
    %c0_18 = arith.constant 0 : index
    %c0_19 = arith.constant 0 : index
    %24 = vector.load %arg2[%c0_17, %c0_18, %c0_19] : memref<9x4x2xf32, #tpu.memory_space<vmem>>, vector<1x4x2xf32>
    %25 = vector.shape_cast %24 : vector<1x4x2xf32> to vector<4x2xf32>
    %26 = vector.shape_cast %23 : vector<2x8x8xf32> to vector<2x64xf32>
    %cst_20 = arith.constant dense<0.000000e+00> : vector<4x64xf32>
    %27 = tpu.matmul %25, %26, %cst_20 {dimension_numbers = #tpu.dot_dimension_numbers<[1], [0], [0], [1], [0, 0, 1, 1], [], []>} : vector<4x2xf32>, vector<2x64xf32>, vector<4x64xf32> -> vector<4x64xf32>
    %28 = arith.addf %17, %27 : vector<4x64xf32>
    %c0_21 = arith.constant 0 : index
    %c8_22 = arith.constant 8 : index
    %c0_23 = arith.constant 0 : index
    %29 = tpu.strided_load %arg9[%c0_21, %c8_22, %c0_23] {strides = array<i32: 1, 2, 1>} : memref<2x24x8xf32, #tpu.memory_space<vmem>>, vector<2x8x8xf32>
    %c3 = arith.constant 3 : index
    %c0_24 = arith.constant 0 : index
    %c0_25 = arith.constant 0 : index
    %30 = vector.load %arg2[%c3, %c0_24, %c0_25] : memref<9x4x2xf32, #tpu.memory_space<vmem>>, vector<1x4x2xf32>
    %31 = vector.shape_cast %30 : vector<1x4x2xf32> to vector<4x2xf32>
    %32 = vector.shape_cast %29 : vector<2x8x8xf32> to vector<2x64xf32>
    %cst_26 = arith.constant dense<0.000000e+00> : vector<4x64xf32>
    %33 = tpu.matmul %31, %32, %cst_26 {dimension_numbers = #tpu.dot_dimension_numbers<[1], [0], [0], [1], [0, 0, 1, 1], [], []>} : vector<4x2xf32>, vector<2x64xf32>, vector<4x64xf32> -> vector<4x64xf32>
    %34 = arith.addf %28, %33 : vector<4x64xf32>
    %c0_27 = arith.constant 0 : index
    %c9 = arith.constant 9 : index
    %c0_28 = arith.constant 0 : index
    %35 = tpu.strided_load %arg9[%c0_27, %c9, %c0_28] {strides = array<i32: 1, 2, 1>} : memref<2x24x8xf32, #tpu.memory_space<vmem>>, vector<2x8x8xf32>
    %c6 = arith.constant 6 : index
    %c0_29 = arith.constant 0 : index
    %c0_30 = arith.constant 0 : index
    %36 = vector.load %arg2[%c6, %c0_29, %c0_30] : memref<9x4x2xf32, #tpu.memory_space<vmem>>, vector<1x4x2xf32>
    %37 = vector.shape_cast %36 : vector<1x4x2xf32> to vector<4x2xf32>
    %38 = vector.shape_cast %35 : vector<2x8x8xf32> to vector<2x64xf32>
    %cst_31 = arith.constant dense<0.000000e+00> : vector<4x64xf32>
    %39 = tpu.matmul %37, %38, %cst_31 {dimension_numbers = #tpu.dot_dimension_numbers<[1], [0], [0], [1], [0, 0, 1, 1], [], []>} : vector<4x2xf32>, vector<2x64xf32>, vector<4x64xf32> -> vector<4x64xf32>
    %40 = arith.addf %34, %39 : vector<4x64xf32>
    %c1 = arith.constant 1 : index
    %c0_32 = arith.constant 0 : index
    %c0_33 = arith.constant 0 : index
    %41 = vector.load %arg6[%c1, %c0_32, %c0_33] : memref<3x15x8xf32, #tpu.memory_space<vmem>>, vector<1x15x8xf32>
    %42 = vector.shape_cast %41 : vector<1x15x8xf32> to vector<15x8xf32>
    %cst_34 = arith.constant dense<0.000000e+00> : vector<32x8xf32>
    %43 = tpu.matmul %16, %42, %cst_34 {dimension_numbers = #tpu.dot_dimension_numbers<[1], [0], [0], [1], [0, 0, 1, 1], [], []>} : vector<32x15xf32>, vector<15x8xf32>, vector<32x8xf32> -> vector<32x8xf32>
    %44 = vector.shape_cast %43 : vector<32x8xf32> to vector<2x16x8xf32>
    %c0_35 = arith.constant 0 : index
    %c8_36 = arith.constant 8 : index
    %c0_37 = arith.constant 0 : index
    %45 = vector.load %arg9[%c0_35, %c8_36, %c0_37] : memref<2x24x8xf32, #tpu.memory_space<vmem>>, vector<2x16x8xf32>
    tpu.vector_store %arg9[%c0_35, %c8_36, %c0_37], %44 {strides = array<i32>} : memref<2x24x8xf32, #tpu.memory_space<vmem>>, vector<2x16x8xf32>,
    %c0_38 = arith.constant 0 : index
    %c7_39 = arith.constant 7 : index
    %c0_40 = arith.constant 0 : index
    %46 = tpu.strided_load %arg9[%c0_38, %c7_39, %c0_40] {strides = array<i32: 1, 2, 1>} : memref<2x24x8xf32, #tpu.memory_space<vmem>>, vector<2x8x8xf32>
    %c1_41 = arith.constant 1 : index
    %c0_42 = arith.constant 0 : index
    %c0_43 = arith.constant 0 : index
    %47 = vector.load %arg2[%c1_41, %c0_42, %c0_43] : memref<9x4x2xf32, #tpu.memory_space<vmem>>, vector<1x4x2xf32>
    %48 = vector.shape_cast %47 : vector<1x4x2xf32> to vector<4x2xf32>
    %49 = vector.shape_cast %46 : vector<2x8x8xf32> to vector<2x64xf32>
    %cst_44 = arith.constant dense<0.000000e+00> : vector<4x64xf32>
    %50 = tpu.matmul %48, %49, %cst_44 {dimension_numbers = #tpu.dot_dimension_numbers<[1], [0], [0], [1], [0, 0, 1, 1], [], []>} : vector<4x2xf32>, vector<2x64xf32>, vector<4x64xf32> -> vector<4x64xf32>
    %51 = arith.addf %40, %50 : vector<4x64xf32>
    %c0_45 = arith.constant 0 : index
    %c8_46 = arith.constant 8 : index
    %c0_47 = arith.constant 0 : index
    %52 = tpu.strided_load %arg9[%c0_45, %c8_46, %c0_47] {strides = array<i32: 1, 2, 1>} : memref<2x24x8xf32, #tpu.memory_space<vmem>>, vector<2x8x8xf32>
    %c4 = arith.constant 4 : index
    %c0_48 = arith.constant 0 : index
    %c0_49 = arith.constant 0 : index
    %53 = vector.load %arg2[%c4, %c0_48, %c0_49] : memref<9x4x2xf32, #tpu.memory_space<vmem>>, vector<1x4x2xf32>
    %54 = vector.shape_cast %53 : vector<1x4x2xf32> to vector<4x2xf32>
    %55 = vector.shape_cast %52 : vector<2x8x8xf32> to vector<2x64xf32>
    %cst_50 = arith.constant dense<0.000000e+00> : vector<4x64xf32>
    %56 = tpu.matmul %54, %55, %cst_50 {dimension_numbers = #tpu.dot_dimension_numbers<[1], [0], [0], [1], [0, 0, 1, 1], [], []>} : vector<4x2xf32>, vector<2x64xf32>, vector<4x64xf32> -> vector<4x64xf32>
    %57 = arith.addf %51, %56 : vector<4x64xf32>
    %c0_51 = arith.constant 0 : index
    %c9_52 = arith.constant 9 : index
    %c0_53 = arith.constant 0 : index
    %58 = tpu.strided_load %arg9[%c0_51, %c9_52, %c0_53] {strides = array<i32: 1, 2, 1>} : memref<2x24x8xf32, #tpu.memory_space<vmem>>, vector<2x8x8xf32>
    %c7_54 = arith.constant 7 : index
    %c0_55 = arith.constant 0 : index
    %c0_56 = arith.constant 0 : index
    %59 = vector.load %arg2[%c7_54, %c0_55, %c0_56] : memref<9x4x2xf32, #tpu.memory_space<vmem>>, vector<1x4x2xf32>
    %60 = vector.shape_cast %59 : vector<1x4x2xf32> to vector<4x2xf32>
    %61 = vector.shape_cast %58 : vector<2x8x8xf32> to vector<2x64xf32>
    %cst_57 = arith.constant dense<0.000000e+00> : vector<4x64xf32>
    %62 = tpu.matmul %60, %61, %cst_57 {dimension_numbers = #tpu.dot_dimension_numbers<[1], [0], [0], [1], [0, 0, 1, 1], [], []>} : vector<4x2xf32>, vector<2x64xf32>, vector<4x64xf32> -> vector<4x64xf32>
    %63 = arith.addf %57, %62 : vector<4x64xf32>
    %c2 = arith.constant 2 : index
    %c0_58 = arith.constant 0 : index
    %c0_59 = arith.constant 0 : index
    %64 = vector.load %arg6[%c2, %c0_58, %c0_59] : memref<3x15x8xf32, #tpu.memory_space<vmem>>, vector<1x15x8xf32>
    %65 = vector.shape_cast %64 : vector<1x15x8xf32> to vector<15x8xf32>
    %cst_60 = arith.constant dense<0.000000e+00> : vector<32x8xf32>
    %66 = tpu.matmul %16, %65, %cst_60 {dimension_numbers = #tpu.dot_dimension_numbers<[1], [0], [0], [1], [0, 0, 1, 1], [], []>} : vector<32x15xf32>, vector<15x8xf32>, vector<32x8xf32> -> vector<32x8xf32>
    %67 = vector.shape_cast %66 : vector<32x8xf32> to vector<2x16x8xf32>
    %c0_61 = arith.constant 0 : index
    %c8_62 = arith.constant 8 : index
    %c0_63 = arith.constant 0 : index
    %68 = vector.load %arg9[%c0_61, %c8_62, %c0_63] : memref<2x24x8xf32, #tpu.memory_space<vmem>>, vector<2x16x8xf32>
    tpu.vector_store %arg9[%c0_61, %c8_62, %c0_63], %67 {strides = array<i32>} : memref<2x24x8xf32, #tpu.memory_space<vmem>>, vector<2x16x8xf32>,
    %c0_64 = arith.constant 0 : index
    %c7_65 = arith.constant 7 : index
    %c0_66 = arith.constant 0 : index
    %69 = tpu.strided_load %arg9[%c0_64, %c7_65, %c0_66] {strides = array<i32: 1, 2, 1>} : memref<2x24x8xf32, #tpu.memory_space<vmem>>, vector<2x8x8xf32>
    %c2_67 = arith.constant 2 : index
    %c0_68 = arith.constant 0 : index
    %c0_69 = arith.constant 0 : index
    %70 = vector.load %arg2[%c2_67, %c0_68, %c0_69] : memref<9x4x2xf32, #tpu.memory_space<vmem>>, vector<1x4x2xf32>
    %71 = vector.shape_cast %70 : vector<1x4x2xf32> to vector<4x2xf32>
    %72 = vector.shape_cast %69 : vector<2x8x8xf32> to vector<2x64xf32>
    %cst_70 = arith.constant dense<0.000000e+00> : vector<4x64xf32>
    %73 = tpu.matmul %71, %72, %cst_70 {dimension_numbers = #tpu.dot_dimension_numbers<[1], [0], [0], [1], [0, 0, 1, 1], [], []>} : vector<4x2xf32>, vector<2x64xf32>, vector<4x64xf32> -> vector<4x64xf32>
    %74 = arith.addf %63, %73 : vector<4x64xf32>
    %c0_71 = arith.constant 0 : index
    %c8_72 = arith.constant 8 : index
    %c0_73 = arith.constant 0 : index
    %75 = tpu.strided_load %arg9[%c0_71, %c8_72, %c0_73] {strides = array<i32: 1, 2, 1>} : memref<2x24x8xf32, #tpu.memory_space<vmem>>, vector<2x8x8xf32>
    %c5 = arith.constant 5 : index
    %c0_74 = arith.constant 0 : index
    %c0_75 = arith.constant 0 : index
    %76 = vector.load %arg2[%c5, %c0_74, %c0_75] : memref<9x4x2xf32, #tpu.memory_space<vmem>>, vector<1x4x2xf32>
    %77 = vector.shape_cast %76 : vector<1x4x2xf32> to vector<4x2xf32>
    %78 = vector.shape_cast %75 : vector<2x8x8xf32> to vector<2x64xf32>
    %cst_76 = arith.constant dense<0.000000e+00> : vector<4x64xf32>
    %79 = tpu.matmul %77, %78, %cst_76 {dimension_numbers = #tpu.dot_dimension_numbers<[1], [0], [0], [1], [0, 0, 1, 1], [], []>} : vector<4x2xf32>, vector<2x64xf32>, vector<4x64xf32> -> vector<4x64xf32>
    %80 = arith.addf %74, %79 : vector<4x64xf32>
    %c0_77 = arith.constant 0 : index
    %c9_78 = arith.constant 9 : index
    %c0_79 = arith.constant 0 : index
    %81 = tpu.strided_load %arg9[%c0_77, %c9_78, %c0_79] {strides = array<i32: 1, 2, 1>} : memref<2x24x8xf32, #tpu.memory_space<vmem>>, vector<2x8x8xf32>
    %c8_80 = arith.constant 8 : index
    %c0_81 = arith.constant 0 : index
    %c0_82 = arith.constant 0 : index
    %82 = vector.load %arg2[%c8_80, %c0_81, %c0_82] : memref<9x4x2xf32, #tpu.memory_space<vmem>>, vector<1x4x2xf32>
    %83 = vector.shape_cast %82 : vector<1x4x2xf32> to vector<4x2xf32>
    %84 = vector.shape_cast %81 : vector<2x8x8xf32> to vector<2x64xf32>
    %cst_83 = arith.constant dense<0.000000e+00> : vector<4x64xf32>
    %85 = tpu.matmul %83, %84, %cst_83 {dimension_numbers = #tpu.dot_dimension_numbers<[1], [0], [0], [1], [0, 0, 1, 1], [], []>} : vector<4x2xf32>, vector<2x64xf32>, vector<4x64xf32> -> vector<4x64xf32>
    %86 = arith.addf %80, %85 : vector<4x64xf32>
    %c0_84 = arith.constant 0 : index
    %c0_85 = arith.constant 0 : index
    %87 = vector.load %arg3[%c0_84, %c0_85] : memref<4x1xf32, #tpu.memory_space<vmem>>, vector<4x1xf32>
    %88 = vector.broadcast %87 : vector<4x1xf32> to vector<4x64xf32>
    %89 = arith.addf %86, %88 : vector<4x64xf32>
    %cst_86 = arith.constant 0.000000e+00 : f32
    %90 = vector.broadcast %cst_86 : f32 to vector<4x64xf32>
    %91 = arith.subf %90, %89 : vector<4x64xf32>
    %92 = math.exp %91 : vector<4x64xf32>
    %cst_87 = arith.constant 1.000000e+00 : f32
    %93 = vector.broadcast %cst_87 : f32 to vector<4x64xf32>
    %94 = arith.addf %93, %92 : vector<4x64xf32>
    %95 = tpu.reciprocal %94 {approx = true} : vector<4x64xf32> -> vector<4x64xf32>
    %96 = arith.mulf %89, %95 : vector<4x64xf32>
    %c0_88 = arith.constant 0 : index
    %c0_89 = arith.constant 0 : index
    %c0_90 = arith.constant 0 : index
    %97 = vector.load %arg8[%c0_88, %c0_89, %c0_90] : memref<1x8x64xf32, #tpu.memory_space<vmem>>, vector<1x4x64xf32>
    %98 = vector.shape_cast %97 : vector<1x4x64xf32> to vector<4x64xf32>
    %99 = vector.shape_cast %96 : vector<4x64xf32> to vector<1x4x64xf32>
    tpu.vector_store %arg8[%c0_88, %c0_89, %c0_90], %99 {strides = array<i32>} : memref<1x8x64xf32, #tpu.memory_space<vmem>>, vector<1x4x64xf32>,
    %100 = vector.extract_strided_slice %12 {offsets = [2, 0, 0], sizes = [2, 16, 15], strides = [1, 1, 1]} : vector<4x16x15xf32> to vector<2x16x15xf32>
    %cst_91 = arith.constant -1.000000e+30 : f32
    %101 = vector.broadcast %cst_91 : f32 to vector<2x16x1xf32>
    %102 = vector.extract_strided_slice %100 {offsets = [0, 0, 1], sizes = [2, 16, 14], strides = [1, 1, 1]} : vector<2x16x15xf32> to vector<2x16x14xf32>
    %103 = tpu.concatenate %102, %101 in 2 : vector<2x16x14xf32>, vector<2x16x1xf32> -> vector<2x16x15xf32>
    %104 = vector.extract_strided_slice %100 {offsets = [0, 0, 0], sizes = [2, 16, 14], strides = [1, 1, 1]} : vector<2x16x15xf32> to vector<2x16x14xf32>
    %105 = tpu.concatenate %101, %104 in 2 : vector<2x16x1xf32>, vector<2x16x14xf32> -> vector<2x16x15xf32>
    %106 = arith.maximumf %103, %105 : vector<2x16x15xf32>
    %107 = arith.maximumf %100, %106 : vector<2x16x15xf32>
    %cst_92 = arith.constant -1.000000e+30 : f32
    %108 = vector.broadcast %cst_92 : f32 to vector<2x1x15xf32>
    %109 = vector.extract_strided_slice %107 {offsets = [0, 1, 0], sizes = [2, 15, 15], strides = [1, 1, 1]} : vector<2x16x15xf32> to vector<2x15x15xf32>
    %110 = tpu.concatenate %109, %108 in 1 : vector<2x15x15xf32>, vector<2x1x15xf32> -> vector<2x16x15xf32>
    %111 = vector.extract_strided_slice %107 {offsets = [0, 0, 0], sizes = [2, 15, 15], strides = [1, 1, 1]} : vector<2x16x15xf32> to vector<2x15x15xf32>
    %112 = tpu.concatenate %108, %111 in 1 : vector<2x1x15xf32>, vector<2x15x15xf32> -> vector<2x16x15xf32>
    %113 = tpu.iota {dimensions = array<i32: 1>} : vector<1x16x1xi32>
    %c14_i32 = arith.constant 14 : i32
    %114 = vector.broadcast %c14_i32 : i32 to vector<1x16x1xi32>
    %115 = arith.cmpi slt, %113, %114 : vector<1x16x1xi32>
    %cst_93 = arith.constant -1.000000e+30 : f32
    %116 = vector.shape_cast %115 : vector<1x16x1xi1> to vector<1x16x1xi1>
    %117 = vector.broadcast %116 : vector<1x16x1xi1> to vector<2x16x15xi1>
    %118 = vector.broadcast %cst_93 : f32 to vector<2x16x15xf32>
    %119 = arith.select %117, %110, %118 : vector<2x16x15xi1>, vector<2x16x15xf32>
    %120 = arith.maximumf %119, %112 : vector<2x16x15xf32>
    %121 = arith.maximumf %107, %120 : vector<2x16x15xf32>
    %122 = vector.shape_cast %121 : vector<2x16x15xf32> to vector<32x15xf32>
    %c0_94 = arith.constant 0 : index
    %c0_95 = arith.constant 0 : index
    %123 = vector.load %arg7[%c0_94, %c0_95] : memref<15x8xf32, #tpu.memory_space<vmem>>, vector<15x8xf32>
    %cst_96 = arith.constant dense<0.000000e+00> : vector<32x8xf32>
    %124 = tpu.matmul %122, %123, %cst_96 {dimension_numbers = #tpu.dot_dimension_numbers<[1], [0], [0], [1], [0, 0, 1, 1], [], []>} : vector<32x15xf32>, vector<15x8xf32>, vector<32x8xf32> -> vector<32x8xf32>
    %125 = vector.shape_cast %124 : vector<32x8xf32> to vector<2x16x8xf32>
    %c0_97 = arith.constant 0 : index
    %c8_98 = arith.constant 8 : index
    %c0_99 = arith.constant 0 : index
    %126 = vector.load %arg9[%c0_97, %c8_98, %c0_99] : memref<2x24x8xf32, #tpu.memory_space<vmem>>, vector<2x16x8xf32>
    tpu.vector_store %arg9[%c0_97, %c8_98, %c0_99], %125 {strides = array<i32>} : memref<2x24x8xf32, #tpu.memory_space<vmem>>, vector<2x16x8xf32>,
    %c0_100 = arith.constant 0 : index
    %c8_101 = arith.constant 8 : index
    %c0_102 = arith.constant 0 : index
    %127 = tpu.strided_load %arg9[%c0_100, %c8_101, %c0_102] {strides = array<i32: 1, 2, 1>} : memref<2x24x8xf32, #tpu.memory_space<vmem>>, vector<2x8x8xf32>
    %c0_103 = arith.constant 0 : index
    %c0_104 = arith.constant 0 : index
    %128 = vector.load %arg4[%c0_103, %c0_104] : memref<4x2xf32, #tpu.memory_space<vmem>>, vector<4x2xf32>
    %129 = vector.shape_cast %127 : vector<2x8x8xf32> to vector<2x64xf32>
    %cst_105 = arith.constant dense<0.000000e+00> : vector<4x64xf32>
    %130 = tpu.matmul %128, %129, %cst_105 {dimension_numbers = #tpu.dot_dimension_numbers<[1], [0], [0], [1], [0, 0, 1, 1], [], []>} : vector<4x2xf32>, vector<2x64xf32>, vector<4x64xf32> -> vector<4x64xf32>
    %c0_106 = arith.constant 0 : index
    %c0_107 = arith.constant 0 : index
    %131 = vector.load %arg5[%c0_106, %c0_107] : memref<4x1xf32, #tpu.memory_space<vmem>>, vector<4x1xf32>
    %132 = vector.broadcast %131 : vector<4x1xf32> to vector<4x64xf32>
    %133 = arith.addf %130, %132 : vector<4x64xf32>
    %cst_108 = arith.constant 0.000000e+00 : f32
    %134 = vector.broadcast %cst_108 : f32 to vector<4x64xf32>
    %135 = arith.subf %134, %133 : vector<4x64xf32>
    %136 = math.exp %135 : vector<4x64xf32>
    %cst_109 = arith.constant 1.000000e+00 : f32
    %137 = vector.broadcast %cst_109 : f32 to vector<4x64xf32>
    %138 = arith.addf %137, %136 : vector<4x64xf32>
    %139 = tpu.reciprocal %138 {approx = true} : vector<4x64xf32> -> vector<4x64xf32>
    %140 = arith.mulf %133, %139 : vector<4x64xf32>
    %c0_110 = arith.constant 0 : index
    %c4_111 = arith.constant 4 : index
    %c0_112 = arith.constant 0 : index
    %141 = vector.load %arg8[%c0_110, %c4_111, %c0_112] : memref<1x8x64xf32, #tpu.memory_space<vmem>>, vector<1x4x64xf32>
    %142 = vector.shape_cast %141 : vector<1x4x64xf32> to vector<4x64xf32>
    %143 = vector.shape_cast %140 : vector<4x64xf32> to vector<1x4x64xf32>
    tpu.vector_store %arg8[%c0_110, %c4_111, %c0_112], %143 {strides = array<i32>} : memref<1x8x64xf32, #tpu.memory_space<vmem>>, vector<1x4x64xf32>,
    return
  }
  func.func @transform_0(%arg0: i32) -> (i32, i32, i32, i32) {
    %c0_i32 = arith.constant 0 : i32
    %c0_i32_0 = arith.constant 0 : i32
    %c0_i32_1 = arith.constant 0 : i32
    %c0_i32_2 = arith.constant 0 : i32
    return %arg0, %c0_i32, %c0_i32_0, %c0_i32_1 : i32, i32, i32, i32
  }
  func.func @transform_1(%arg0: i32) -> (i32, i32, i32) {
    %c0_i32 = arith.constant 0 : i32
    %c0_i32_0 = arith.constant 0 : i32
    %c0_i32_1 = arith.constant 0 : i32
    %c0_i32_2 = arith.constant 0 : i32
    return %c0_i32, %c0_i32_0, %c0_i32_1 : i32, i32, i32
  }
  func.func @transform_2(%arg0: i32) -> (i32, i32) {
    %c0_i32 = arith.constant 0 : i32
    %c0_i32_0 = arith.constant 0 : i32
    %c0_i32_1 = arith.constant 0 : i32
    return %c0_i32, %c0_i32_0 : i32, i32
  }
  func.func @transform_3(%arg0: i32) -> (i32, i32) {
    %c0_i32 = arith.constant 0 : i32
    %c0_i32_0 = arith.constant 0 : i32
    %c0_i32_1 = arith.constant 0 : i32
    return %c0_i32, %c0_i32_0 : i32, i32
  }
  func.func @transform_4(%arg0: i32) -> (i32, i32) {
    %c0_i32 = arith.constant 0 : i32
    %c0_i32_0 = arith.constant 0 : i32
    %c0_i32_1 = arith.constant 0 : i32
    return %c0_i32, %c0_i32_0 : i32, i32
  }
  func.func @transform_5(%arg0: i32) -> (i32, i32, i32) {
    %c0_i32 = arith.constant 0 : i32
    %c0_i32_0 = arith.constant 0 : i32
    %c0_i32_1 = arith.constant 0 : i32
    %c0_i32_2 = arith.constant 0 : i32
    return %c0_i32, %c0_i32_0, %c0_i32_1 : i32, i32, i32
  }
  func.func @transform_6(%arg0: i32) -> (i32, i32) {
    %c0_i32 = arith.constant 0 : i32
    %c0_i32_0 = arith.constant 0 : i32
    %c0_i32_1 = arith.constant 0 : i32
    return %c0_i32, %c0_i32_0 : i32, i32
  }
  func.func @transform_7(%arg0: i32) -> (i32, i32, i32) {
    %c0_i32 = arith.constant 0 : i32
    %c0_i32_0 = arith.constant 0 : i32
    %c0_i32_1 = arith.constant 0 : i32
    return %arg0, %c0_i32, %c0_i32_0 : i32, i32, i32
  }
}

</mosaic_0001>

<llo_original>
// kernel: tpu_custom_call.1
$region0: #{tpu_custom_call.1}
  #allocation0 [shape = 'u32[]', space=smem, size = 0x4, offset = 0x4, fixed_abs, tag = 'smem constant byte address 0x4 - core index']
  #allocation1 [shape = 'u32[144,128]{1,0:T(1,128)}', space=vmem, size = 0x12000, scoped, tag = 'internal scratch']
  #allocation2 [shape = 'f32[2,24,8]{2,1,0:T(8,128)}', space=vmem, size = 0x6000, scoped, tag = 'scratch operand']
  %s0 = inlined_call_operand.hbm [shape: f32[4,4,16,16], index: 0, kind: input, shape index: {}]
  %s1 = inlined_call_operand.vmem [shape: f32[9,4,2], index: 1, kind: input, shape index: {}]
  %s2 = inlined_call_operand.vmem [shape: f32[4,1], index: 2, kind: input, shape index: {}]
  %s3 = inlined_call_operand.vmem [shape: f32[4,2], index: 3, kind: input, shape index: {}]
  %s4 = inlined_call_operand.vmem [shape: f32[4,1], index: 4, kind: input, shape index: {}]
  %s5 = inlined_call_operand.vmem [shape: f32[3,15,8], index: 5, kind: input, shape index: {}]
  %s6 = inlined_call_operand.vmem [shape: f32[15,8], index: 6, kind: input, shape index: {}]
  %s7 = inlined_call_operand.hbm [shape: f32[4,8,64], index: 7, kind: output, shape index: {}]
  %s8 = sld [smem:[#allocation0]]
  $region65: #{tpu_custom_call.1} parent=0
    _
  %s10 = ssub.s32 1, %s8
  %s11 = scalar_select 0, %s10, %s8
  $region1: #{tpu_custom_call.1} parent=0
    #allocation3 [shape = 'u8[65536]{0}', space=vmem, size = 0x10000, scoped, tag = 'input window, operand 0']
    #allocation4 [shape = 's32[2]{0}', space=sflag, size = 0x8, scoped, tag = 'scoped memory for tpu_custom_call.1']
    #allocation5 [shape = 's32[2]{0}', space=sflag, size = 0x8, scoped, tag = 'scoped memory for tpu_custom_call.1']
    #allocation6 [shape = 'u8[8192]{0}', space=vmem, size = 0x2000, scoped, tag = 'output window, operand 0']
    %12 = vsyncpa [#allocation4], 0
    %s13 = scalar_lea.sflag [#allocation4], 1
    %14 = vsyncpa %s13, 0
    %15 = vsyncpa [#allocation5], 0
    %s16 = scalar_lea.sflag [#allocation5], 1
    %17 = vsyncpa %s16, 0
    loop: start=0, step=1, limit=6
    $region2: #{tpu_custom_call.1} parent=1 // loop_pre_header
      _
    $region3: #{tpu_custom_call.1} parent=1 // loop_header
      %s19 = sphi 0, %s23
      %p20 = scmp.ge.s32.totalorder %s19, 6
      %s29 = sphi 0, %s31
      %s32 = sphi 0, %s29
      %s33 = sphi 0, %s32
      %s49 = sphi 0, %s33
      %s53 = sphi 0, %s53
      %s55 = sphi 0, %s53
      %s56 = sphi 0, %s55
      %s70 = sphi 0, %s56
      %s74 = sphi 0, %s74
      %s76 = sphi 0, %s74
      %s77 = sphi 0, %s76
      %s91 = sphi 0, %s77
      %s95 = sphi 0, %s95
      %s97 = sphi 0, %s95
      %s98 = sphi 0, %s97
      %s112 = sphi 0, %s98
      %s116 = sphi 0, %s116
      %s118 = sphi 0, %s116
      %s119 = sphi 0, %s118
      %s133 = sphi 0, %s119
      %s137 = sphi 0, %s137
      %s139 = sphi 0, %s137
      %s140 = sphi 0, %s139
      %s154 = sphi 0, %s140
      %s158 = sphi 0, %s158
      %s160 = sphi 0, %s158
      %s161 = sphi 0, %s160
      %s175 = sphi 0, %s161
      %s181 = sphi 0, %s183
      %s184 = sphi 0, %s181
      %s185 = sphi 0, %s184
      %s201 = sphi 0, %s185
    $region4: #{tpu_custom_call.1} parent=1 // loop_header_branch
      %22 = sbr.rel (%p20) target = $region8
    $region5: #{tpu_custom_call.1} parent=1 // loop_body
      %s24 = ssub.s32 %s19, 1
      %s25 = ssub.s32 %s19, 2
      %s26 = sadd.s32 %s19, 1
      %s27 = ssub.s32 %s19, %s26
      %p28 = scmp.eq.s32.totalorder %s27, 0
      %s30 = sadd.s32 %s29, 1
      %s31 = scalar_select %p28, %s29, %s30
      %p34 = pneg %p28
      %p35 = scmp.eq.s32.totalorder %s19, 3
      %p36 = por %p34, %p35
      %p37 = scmp.ne.s32.totalorder %s29, %s32
      %p38 = scmp.eq.s32.totalorder %s19, 0
      %p39 = por %p37, %p38
      %p40 = scmp.ne.s32.totalorder %s29, %s32
      %p41 = scmp.eq.s32.totalorder %s24, 3
      %p42 = por %p40, %p41
      %p43 = scmp.ne.s32.totalorder %s32, %s33
      %p44 = scmp.eq.s32.totalorder %s24, 0
      %p45 = por %p43, %p44
      %p46 = scmp.ne.s32.totalorder %s32, %s33
      %p47 = scmp.eq.s32.totalorder %s25, 3
      %p48 = por %p46, %p47
      %p50 = scmp.ne.s32.totalorder %s33, %s49
      %p51 = scmp.eq.s32.totalorder %s25, 0
      %p52 = por %p50, %p51
      %s54 = sadd.s32 %s53, 1
      %p57 = scmp.eq.s32.totalorder %s19, 3
      %p58 = scmp.ne.s32.totalorder %s53, %s55
      %p59 = scmp.eq.s32.totalorder %s19, 0
      %p60 = por %p58, %p59
      %p61 = scmp.ne.s32.totalorder %s53, %s55
      %p62 = scmp.eq.s32.totalorder %s24, 3
      %p63 = por %p61, %p62
      %p64 = scmp.ne.s32.totalorder %s55, %s56
      %p65 = scmp.eq.s32.totalorder %s24, 0
      %p66 = por %p64, %p65
      %p67 = scmp.ne.s32.totalorder %s55, %s56
      %p68 = scmp.eq.s32.totalorder %s25, 3
      %p69 = por %p67, %p68
      %p71 = scmp.ne.s32.totalorder %s56, %s70
      %p72 = scmp.eq.s32.totalorder %s25, 0
      %p73 = por %p71, %p72
      %s75 = sadd.s32 %s74, 1
      %p78 = scmp.eq.s32.totalorder %s19, 3
      %p79 = scmp.ne.s32.totalorder %s74, %s76
      %p80 = scmp.eq.s32.totalorder %s19, 0
      %p81 = por %p79, %p80
      %p82 = scmp.ne.s32.totalorder %s74, %s76
      %p83 = scmp.eq.s32.totalorder %s24, 3
      %p84 = por %p82, %p83
      %p85 = scmp.ne.s32.totalorder %s76, %s77
      %p86 = scmp.eq.s32.totalorder %s24, 0
      %p87 = por %p85, %p86
      %p88 = scmp.ne.s32.totalorder %s76, %s77
      %p89 = scmp.eq.s32.totalorder %s25, 3
      %p90 = por %p88, %p89
      %p92 = scmp.ne.s32.totalorder %s77, %s91
      %p93 = scmp.eq.s32.totalorder %s25, 0
      %p94 = por %p92, %p93
      %s96 = sadd.s32 %s95, 1
      %p99 = scmp.eq.s32.totalorder %s19, 3
      %p100 = scmp.ne.s32.totalorder %s95, %s97
      %p101 = scmp.eq.s32.totalorder %s19, 0
      %p102 = por %p100, %p101
      %p103 = scmp.ne.s32.totalorder %s95, %s97
      %p104 = scmp.eq.s32.totalorder %s24, 3
      %p105 = por %p103, %p104
      %p106 = scmp.ne.s32.totalorder %s97, %s98
      %p107 = scmp.eq.s32.totalorder %s24, 0
      %p108 = por %p106, %p107
      %p109 = scmp.ne.s32.totalorder %s97, %s98
      %p110 = scmp.eq.s32.totalorder %s25, 3
      %p111 = por %p109, %p110
      %p113 = scmp.ne.s32.totalorder %s98, %s112
      %p114 = scmp.eq.s32.totalorder %s25, 0
      %p115 = por %p113, %p114
      %s117 = sadd.s32 %s116, 1
      %p120 = scmp.eq.s32.totalorder %s19, 3
      %p121 = scmp.ne.s32.totalorder %s116, %s118
      %p122 = scmp.eq.s32.totalorder %s19, 0
      %p123 = por %p121, %p122
      %p124 = scmp.ne.s32.totalorder %s116, %s118
      %p125 = scmp.eq.s32.totalorder %s24, 3
      %p126 = por %p124, %p125
      %p127 = scmp.ne.s32.totalorder %s118, %s119
      %p128 = scmp.eq.s32.totalorder %s24, 0
      %p129 = por %p127, %p128
      %p130 = scmp.ne.s32.totalorder %s118, %s119
      %p131 = scmp.eq.s32.totalorder %s25, 3
      %p132 = por %p130, %p131
      %p134 = scmp.ne.s32.totalorder %s119, %s133
      %p135 = scmp.eq.s32.totalorder %s25, 0
      %p136 = por %p134, %p135
      %s138 = sadd.s32 %s137, 1
      %p141 = scmp.eq.s32.totalorder %s19, 3
      %p142 = scmp.ne.s32.totalorder %s137, %s139
      %p143 = scmp.eq.s32.totalorder %s19, 0
      %p144 = por %p142, %p143
      %p145 = scmp.ne.s32.totalorder %s137, %s139
      %p146 = scmp.eq.s32.totalorder %s24, 3
      %p147 = por %p145, %p146
      %p148 = scmp.ne.s32.totalorder %s139, %s140
      %p149 = scmp.eq.s32.totalorder %s24, 0
      %p150 = por %p148, %p149
      %p151 = scmp.ne.s32.totalorder %s139, %s140
      %p152 = scmp.eq.s32.totalorder %s25, 3
      %p153 = por %p151, %p152
      %p155 = scmp.ne.s32.totalorder %s140, %s154
      %p156 = scmp.eq.s32.totalorder %s25, 0
      %p157 = por %p155, %p156
      %s159 = sadd.s32 %s158, 1
      %p162 = scmp.eq.s32.totalorder %s19, 3
      %p163 = scmp.ne.s32.totalorder %s158, %s160
      %p164 = scmp.eq.s32.totalorder %s19, 0
      %p165 = por %p163, %p164
      %p166 = scmp.ne.s32.totalorder %s158, %s160
      %p167 = scmp.eq.s32.totalorder %s24, 3
      %p168 = por %p166, %p167
      %p169 = scmp.ne.s32.totalorder %s160, %s161
      %p170 = scmp.eq.s32.totalorder %s24, 0
      %p171 = por %p169, %p170
      %p172 = scmp.ne.s32.totalorder %s160, %s161
      %p173 = scmp.eq.s32.totalorder %s25, 3
      %p174 = por %p172, %p173
      %p176 = scmp.ne.s32.totalorder %s161, %s175
      %p177 = scmp.eq.s32.totalorder %s25, 0
      %p178 = por %p176, %p177
      %s179 = ssub.s32 %s19, %s26
      %p180 = scmp.eq.s32.totalorder %s179, 0
      %s182 = sadd.s32 %s181, 1
      %s183 = scalar_select %p180, %s181, %s182
      %p186 = pneg %p180
      %p187 = scmp.eq.s32.totalorder %s19, 3
      %p188 = por %p186, %p187
      %p189 = scmp.ne.s32.totalorder %s181, %s184
      %p190 = scmp.eq.s32.totalorder %s19, 0
      %p191 = por %p189, %p190
      %p192 = scmp.ne.s32.totalorder %s181, %s184
      %p193 = scmp.eq.s32.totalorder %s24, 3
      %p194 = por %p192, %p193
      %p195 = scmp.ne.s32.totalorder %s184, %s185
      %p196 = scmp.eq.s32.totalorder %s24, 0
      %p197 = por %p195, %p196
      %p198 = scmp.ne.s32.totalorder %s184, %s185
      %p199 = scmp.eq.s32.totalorder %s25, 3
      %p200 = por %p198, %p199
      %p202 = scmp.ne.s32.totalorder %s185, %s201
      %p203 = scmp.eq.s32.totalorder %s25, 0
      %p204 = por %p202, %p203
      %p205 = scmp.le.s32.totalorder 1, %s19
      %p206 = scmp.lt.s32.totalorder %s19, 5
      %p207 = pnand %p205, %p206
      %p208 = pneg %p207
      // Predicated region
      $region9: #{tpu_custom_call.1} parent=5 // pred_check
        _
      $region10: #{tpu_custom_call.1} parent=5 // pred_check_branch
        %210 = sbr.rel (%p207) target = $region12
      $region11: #{tpu_custom_call.1} parent=5 // pred_region
        %s211 = ssub.s32 %s19, 1
        // Predicated region
        $region13: #{tpu_custom_call.1} parent=11 // pred_check
          %p212 = pneg %p66
        $region14: #{tpu_custom_call.1} parent=11 // pred_check_branch
          %214 = sbr.rel (%p212) target = $region16
        $region15: #{tpu_custom_call.1} parent=11 // pred_region
          _
        $region16: #{tpu_custom_call.1} parent=11 // pred_fallthru
          _
        // Predicated region
        $region17: #{tpu_custom_call.1} parent=11 // pred_check
          %p215 = pneg %p87
        $region18: #{tpu_custom_call.1} parent=11 // pred_check_branch
          %217 = sbr.rel (%p215) target = $region20
        $region19: #{tpu_custom_call.1} parent=11 // pred_region
          _
        $region20: #{tpu_custom_call.1} parent=11 // pred_fallthru
          _
        // Predicated region
        $region21: #{tpu_custom_call.1} parent=11 // pred_check
          %p218 = pneg %p108
        $region22: #{tpu_custom_call.1} parent=11 // pred_check_branch
          %220 = sbr.rel (%p218) target = $region24
        $region23: #{tpu_custom_call.1} parent=11 // pred_region
          _
        $region24: #{tpu_custom_call.1} parent=11 // pred_fallthru
          _
        // Predicated region
        $region25: #{tpu_custom_call.1} parent=11 // pred_check
          %p221 = pneg %p129
        $region26: #{tpu_custom_call.1} parent=11 // pred_check_branch
          %223 = sbr.rel (%p221) target = $region28
        $region27: #{tpu_custom_call.1} parent=11 // pred_region
          _
        $region28: #{tpu_custom_call.1} parent=11 // pred_fallthru
          _
        // Predicated region
        $region29: #{tpu_custom_call.1} parent=11 // pred_check
          %p224 = pneg %p150
        $region30: #{tpu_custom_call.1} parent=11 // pred_check_branch
          %226 = sbr.rel (%p224) target = $region32
        $region31: #{tpu_custom_call.1} parent=11 // pred_region
          _
        $region32: #{tpu_custom_call.1} parent=11 // pred_fallthru
          _
        // Predicated region
        $region33: #{tpu_custom_call.1} parent=11 // pred_check
          %p227 = pneg %p171
        $region34: #{tpu_custom_call.1} parent=11 // pred_check_branch
          %229 = sbr.rel (%p227) target = $region36
        $region35: #{tpu_custom_call.1} parent=11 // pred_region
          _
        $region36: #{tpu_custom_call.1} parent=11 // pred_fallthru
          _
      $region12: #{tpu_custom_call.1} parent=5 // pred_fallthru
        _
      %p230 = scmp.lt.s32.totalorder %s19, 4
      // Predicated region
      $region37: #{tpu_custom_call.1} parent=5 // pred_check
        %p231 = pneg %p230
      $region38: #{tpu_custom_call.1} parent=5 // pred_check_branch
        %233 = sbr.rel (%p231) target = $region40
      $region39: #{tpu_custom_call.1} parent=5 // pred_region
        // Predicated region
        $region41: #{tpu_custom_call.1} parent=39 // pred_check
          %p234 = pneg %p39
        $region42: #{tpu_custom_call.1} parent=39 // pred_check_branch
          %236 = sbr.rel (%p234) target = $region44
        $region43: #{tpu_custom_call.1} parent=39 // pred_region
          %s237 = sand.u32 %s29, 1
          %s238 = scalar_lea.sflag [#allocation4], %s237
          %s239 = sand.u32 %s29, 1
          %s240 = smul.addr %s239, 64
          %s241 = scalar_lea.vmem [#allocation3], %s240
          %s243 = ssub.s32 1024, 1024
          %244 = vsyncadd %s238, %s243
          %s245 = smul.addr %s19, 8
          %s246 = smul.addr %s245, 128
          %s247 = scalar_lea.hbm %s0, %s246
          %s248 = sshll.u32 %s241, 4
          %s249 = int_to_ptr.vmem [resolvable:$true] %s248
          %254 = dma.hbm_to_vmem [thread:$0]  %s247, 1024, %s249, %s238, 128, 128, 8
        $region44: #{tpu_custom_call.1} parent=39 // pred_fallthru
          _
      $region40: #{tpu_custom_call.1} parent=5 // pred_fallthru
        _
      %p255 = scmp.le.s32.totalorder 1, %s19
      %p256 = scmp.lt.s32.totalorder %s19, 5
      %p257 = pnand %p255, %p256
      %p258 = pneg %p257
      // Predicated region
      $region45: #{tpu_custom_call.1} parent=5 // pred_check
        _
      $region46: #{tpu_custom_call.1} parent=5 // pred_check_branch
        %260 = sbr.rel (%p257) target = $region48
      $region47: #{tpu_custom_call.1} parent=5 // pred_region
        %s261 = ssub.s32 %s19, 1
        %s262 = sand.u32 %s32, 1
        %s263 = scalar_lea.sflag [#allocation4], %s262
        %s264 = sand.u32 %s32, 1
        %s265 = smul.addr %s264, 64
        %s266 = scalar_lea.vmem [#allocation3], %s265
        // Predicated region
        $region49: #{tpu_custom_call.1} parent=47 // pred_check
          %p267 = pneg %p45
        $region50: #{tpu_custom_call.1} parent=47 // pred_check_branch
          %269 = sbr.rel (%p267) target = $region52
        $region51: #{tpu_custom_call.1} parent=47 // pred_region
          %270 = dma.done %s263, 1024
        $region52: #{tpu_custom_call.1} parent=47 // pred_fallthru
          _
        %s271 = sand.u32 %s32, 1
        %s272 = scalar_lea.sflag [#allocation4], %s271
        %s273 = sand.u32 %s32, 1
        %s274 = smul.addr %s273, 64
        %s275 = scalar_lea.vmem [#allocation3], %s274
        %p276 = pneg %p45
        %p277 = pneg %p42
        %p278 = pneg %p66
        %p279 = pneg %p63
        %p280 = pneg %p87
        %p281 = pneg %p84
        %p282 = pneg %p108
        %p283 = pneg %p105
        %p284 = pneg %p129
        %p285 = pneg %p126
        %p286 = pneg %p150
        %p287 = pneg %p147
        %p288 = pneg %p171
        %p289 = pneg %p168
        %p290 = pneg %p197
        %p291 = pneg %p194
        %s292 = sand.u32 %s184, 1
        %s293 = scalar_lea.sflag [#allocation5], %s292
        %s294 = sand.u32 %s184, 1
        %s295 = smul.addr %s294, 8
        %s296 = scalar_lea.vmem [#allocation6], %s295
        %v297 = vld [vmem:[%s266] sm:$0xff]
        %v298 = vld [vmem:[%s266 + $0x8] sm:$0xff]
        %v299 = vld [vmem:[%s266 + $0x10] sm:$0xff]
        %v300 = vld [vmem:[%s266 + $0x18] sm:$0xff]
        %v301 = vld [vmem:[%s266 + $0x20] sm:$0xff]
        %v302 = vld [vmem:[%s266 + $0x28] sm:$0xff]
        %v303 = vld [vmem:[%s266 + $0x30] sm:$0xff]
        %v304 = vld [vmem:[%s266 + $0x38] sm:$0xff]
        %vm313 = vcmask 1046528
        %v314 = vrot.slane %v297, 1
        %v315 = vrot.slane %v298, 1
        %v316 = vsel %vm313, %v314, %v315
        %v317 = vrot.slane %v299, 1
        %v318 = vrot.slane %v300, 1
        %v319 = vsel %vm313, %v317, %v318
        %v320 = vrot.slane %v301, 1
        %v321 = vrot.slane %v302, 1
        %v322 = vsel %vm313, %v320, %v321
        %v323 = vrot.slane %v303, 1
        %v324 = vrot.slane %v304, 1
        %v325 = vsel %vm313, %v323, %v324
        %v334 = vadd.f32 %v297, %v316
        %v335 = vadd.f32 %v298, %v315
        %v336 = vadd.f32 %v299, %v319
        %v337 = vadd.f32 %v300, %v318
        %v338 = vadd.f32 %v301, %v322
        %v339 = vadd.f32 %v302, %v321
        %v340 = vadd.f32 %v303, %v325
        %v341 = vadd.f32 %v304, %v324
        %342 = vrot.lane.b32.xlu0 %v297, 127
        %v343 = vpop.permute.xlu0 %342
        %344 = vrot.lane.b32.xlu0 %v298, 127
        %v345 = vpop.permute.xlu0 %344
        %346 = vrot.lane.b32.xlu0 %v299, 127
        %v347 = vpop.permute.xlu0 %346
        %348 = vrot.lane.b32.xlu0 %v300, 127
        %v349 = vpop.permute.xlu0 %348
        %350 = vrot.lane.b32.xlu0 %v301, 127
        %v351 = vpop.permute.xlu0 %350
        %352 = vrot.lane.b32.xlu0 %v302, 127
        %v353 = vpop.permute.xlu0 %352
        %354 = vrot.lane.b32.xlu0 %v303, 127
        %v355 = vpop.permute.xlu0 %354
        %356 = vrot.lane.b32.xlu0 %v304, 127
        %v357 = vpop.permute.xlu0 %356
        %v366 = vadd.f32 %v334, %v343
        %v367 = vadd.f32 %v335, %v345
        %v368 = vadd.f32 %v336, %v347
        %v369 = vadd.f32 %v337, %v349
        %v370 = vadd.f32 %v338, %v351
        %v371 = vadd.f32 %v339, %v353
        %v372 = vadd.f32 %v340, %v355
        %v373 = vadd.f32 %v341, %v357
        %374 = vrot.lane.b32.xlu0 %v316, 127
        %v375 = vpop.permute.xlu0 %374
        %376 = vrot.lane.b32.xlu0 %v315, 127
        %v377 = vpop.permute.xlu0 %376
        %378 = vrot.lane.b32.xlu0 %v319, 127
        %v379 = vpop.permute.xlu0 %378
        %380 = vrot.lane.b32.xlu0 %v318, 127
        %v381 = vpop.permute.xlu0 %380
        %382 = vrot.lane.b32.xlu0 %v322, 127
        %v383 = vpop.permute.xlu0 %382
        %384 = vrot.lane.b32.xlu0 %v321, 127
        %v385 = vpop.permute.xlu0 %384
        %386 = vrot.lane.b32.xlu0 %v325, 127
        %v387 = vpop.permute.xlu0 %386
        %388 = vrot.lane.b32.xlu0 %v324, 127
        %v389 = vpop.permute.xlu0 %388
        %v398 = vadd.f32 %v366, %v375
        %v399 = vadd.f32 %v367, %v377
        %v400 = vadd.f32 %v368, %v379
        %v401 = vadd.f32 %v369, %v381
        %v402 = vadd.f32 %v370, %v383
        %v403 = vadd.f32 %v371, %v385
        %v404 = vadd.f32 %v372, %v387
        %v405 = vadd.f32 %v373, %v389
        %v406 = vmul.f32 %v398, 0.25
        %v407 = vmul.f32 %v399, 0.25
        %v408 = vmul.f32 %v400, 0.25
        %v409 = vmul.f32 %v401, 0.25
        %v410 = vmul.f32 %v402, 0.25
        %v411 = vmul.f32 %v403, 0.25
        %v412 = vmul.f32 %v404, 0.25
        %v413 = vmul.f32 %v405, 0.25
        %v414 = vsel %vm313, %v407, 0.0
        %v415 = vsel %vm313, %v409, 0.0
        %v416 = vsel %vm313, %v411, 0.0
        %v417 = vsel %vm313, %v413, 0.0
        %vm418 = vcmask 64512
        %419 = vst.msk [vmem:[#allocation2] sm:$0xff] %vm418, 0.0
        %420 = vst.msk [vmem:[#allocation2 + $0x18] sm:$0xff] %vm418, 0.0
        %v421 = vld [vmem:[%s5] sm:$0xff]
        %v422 = vld [vmem:[%s5 + $0x8] sm:$0x7f]
        %vm423 = vcmask 121856
        %v425 = vsel %vm423, %v406, 0
        %v428 = vsel %vm423, %v414, 0
        %v431 = vsel %vm423, %v408, 0
        %v434 = vsel %vm423, %v415, 0
        %v437 = vsel %vm313, %v422, 0
        %439 = vmatprep.subr.mxu0 0.0
        %440 = vmatpush1.msra.mxu0 %v421
        %441 = vmatprep.subr.mxu0 0.0
        %442 = vmatpush1.msra.mxu0 %v437
        %443 = vmatprep.subr.mxu0 0.0
        %444 = vmatpush1.msra.mxu0 0.0
        %445 = vmatprep.subr.mxu0 0.0
        %446 = vmatpush1.msra.mxu0 0.0
        %447 = vmatprep.subr.mxu0 0.0
        %448 = vmatpush1.msra.mxu0 0.0
        %449 = vmatprep.subr.mxu0 0.0
        %450 = vmatpush1.msra.mxu0 0.0
        %451 = vmatprep.subr.mxu0 0.0
        %452 = vmatpush1.msra.mxu0 0.0
        %453 = vmatprep.subr.mxu0 0.0
        %454 = vmatpush1.msra.mxu0 0.0
        %455 = vmatprep.subr.mxu0 0.0
        %456 = vmatpush1.msra.mxu0 0.0
        %457 = vmatprep.subr.mxu0 0.0
        %458 = vmatpush1.msra.mxu0 0.0
        %459 = vmatprep.subr.mxu0 0.0
        %460 = vmatpush1.msra.mxu0 0.0
        %461 = vmatprep.subr.mxu0 0.0
        %462 = vmatpush1.msra.mxu0 0.0
        %463 = vmatprep.subr.mxu0 0.0
        %464 = vmatpush1.msra.mxu0 0.0
        %465 = vmatprep.subr.mxu0 0.0
        %466 = vmatpush1.msra.mxu0 0.0
        %467 = vmatprep.subr.mxu0 0.0
        %468 = vmatpush1.msra.mxu0 0.0
        %469 = vmatprep.subr.mxu0 0.0
        %470 = vmatpush1.msra.mxu0 0.0
        %471 = vmatprep.subr.mxu0 0.0
        %472 = vmatpush1.msra.mxu0 0.0
        %473 = vmatprep.subr.mxu0 0.0
        %474 = vmatpush1.msra.mxu0 0.0
        %475 = vmatprep.subr.mxu0 0.0
        %476 = vmatpush1.msra.mxu0 0.0
        %477 = vmatprep.subr.mxu0 0.0
        %478 = vmatpush1.msra.mxu0 0.0
        %479 = vmatprep.subr.mxu0 0.0
        %480 = vmatpush1.msra.mxu0 0.0
        %481 = vmatprep.subr.mxu0 0.0
        %482 = vmatpush1.msra.mxu0 0.0
        %483 = vmatprep.subr.mxu0 0.0
        %484 = vmatpush1.msra.mxu0 0.0
        %485 = vmatprep.subr.mxu0 0.0
        %486 = vmatpush1.msra.mxu0 0.0
        %487 = vmatprep.subr.mxu0 0.0
        %488 = vmatpush1.msra.mxu0 0.0
        %489 = vmatprep.subr.mxu0 0.0
        %490 = vmatpush1.msra.mxu0 0.0
        %491 = vmatprep.subr.mxu0 0.0
        %492 = vmatpush1.msra.mxu0 0.0
        %493 = vmatprep.subr.mxu0 0.0
        %494 = vmatpush1.msra.mxu0 0.0
        %495 = vmatprep.subr.mxu0 0.0
        %496 = vmatpush1.msra.mxu0 0.0
        %497 = vmatprep.subr.mxu0 0.0
        %498 = vmatpush1.msra.mxu0 0.0
        %499 = vmatprep.subr.mxu0 0.0
        %500 = vmatpush1.msra.mxu0 0.0
        %501 = vmatprep.subr.mxu0 0.0
        %502 = vmatpush1.msra.mxu0 0.0
        %503 = vmatprep.mubr.f32.mxu0 0.0
        %504 = vmatmul.mubr.f32.gmra.mrb[0].mxu0 %v425
        %v505 = vpop.f32.mrb[0].mxu0
        %v506 = vadd.f32 0.0, %v505
        %v507 = vpop.f32.mrb[0].mxu0
        %508 = vmatprep.mubr.f32.mxu0 0.0
        %509 = vmatmul.mubr.f32.gmra.mrb[0].mxu0 %v428
        %v510 = vpop.f32.mrb[0].mxu0
        %v511 = vadd.f32 0.0, %v510
        %v512 = vpop.f32.mrb[0].mxu0
        %513 = vmatprep.mubr.f32.mxu0 0.0
        %514 = vmatmul.mubr.f32.gmra.mrb[0].mxu0 %v431
        %v515 = vpop.f32.mrb[0].mxu0
        %v516 = vadd.f32 0.0, %v515
        %v517 = vpop.f32.mrb[0].mxu0
        %518 = vmatprep.mubr.f32.mxu0 0.0
        %519 = vmatmul.mubr.f32.gmra.mrb[0].mxu0 %v434
        %v520 = vpop.f32.mrb[0].mxu0
        %v521 = vadd.f32 0.0, %v520
        %v522 = vpop.f32.mrb[0].mxu0
        %523 = vdwg.mxu0
        %524 = vst.msk [vmem:[#allocation2 + $0x8] sm:$0xff] %vm418, %v506
        %525 = vst.msk [vmem:[#allocation2 + $0x10] sm:$0xff] %vm418, %v511
        %526 = vst.msk [vmem:[#allocation2 + $0x20] sm:$0xff] %vm418, %v516
        %527 = vst.msk [vmem:[#allocation2 + $0x28] sm:$0xff] %vm418, %v521
        %s528 = scalar_lea.vmem [#allocation2], 7
        %v529 = vld [vmem:[%s528] ss:$2 sm:$0xff]
        %s530 = scalar_lea.vmem [#allocation2], 31
        %v531 = vld [vmem:[%s530] ss:$2 sm:$0xff]
        %v532 = vld [vmem:[%s1] sm:$0xf]
        %v533 = vcombine.high %v529, 0.0
        %v535 = vunpack.c.l.s4 1983009808
        %v536 = vunpack.c.0.s8 %v535
        %v537 = vlaneseq
        %v538 = vshrl.u32 %v537, 7
        %v539 = vsub.s32 %v536, %v538
        %v540 = vrot.slane %v529, %v539
        %v542 = vunpack.c.l.s4 1983009808
        %v543 = vunpack.c.0.s8 %v542
        %v544 = vlaneseq
        %v545 = vshrl.u32 %v544, 7
        %v546 = vsub.s32 %v543, %v545
        %v547 = vrot.slane %v533, %v546
        %v548 = vcombine.high %v531, 0.0
        %v550 = vunpack.c.l.s4 1983009808
        %v551 = vunpack.c.0.s8 %v550
        %v552 = vlaneseq
        %v553 = vshrl.u32 %v552, 7
        %v554 = vsub.s32 %v551, %v553
        %v555 = vrot.slane %v531, %v554
        %v557 = vunpack.c.l.s4 1983009808
        %v558 = vunpack.c.0.s8 %v557
        %v559 = vlaneseq
        %v560 = vshrl.u32 %v559, 7
        %v561 = vsub.s32 %v558, %v560
        %v562 = vrot.slane %v548, %v561
        %v563 = vcombine.low %v540, %v555
        %v564 = vcombine.high %v540, %v555
        %v566 = vunpack.c.l.s4 1934713408
        %v567 = vunpack.c.0.s8 %v566
        %v568 = vlaneseq
        %v569 = vshrl.u32 %v568, 7
        %v570 = vsub.s32 %v567, %v569
        %v571 = vrot.slane %v563, %v570
        %v573 = vunpack.c.l.s4 1934713408
        %v574 = vunpack.c.0.s8 %v573
        %v575 = vlaneseq
        %v576 = vshrl.u32 %v575, 7
        %v577 = vsub.s32 %v574, %v576
        %v578 = vrot.slane %v564, %v577
        %v579 = vcombine.low %v547, %v562
        %v580 = vcombine.high %v547, %v562
        %v582 = vunpack.c.l.s4 1934713408
        %v583 = vunpack.c.0.s8 %v582
        %v584 = vlaneseq
        %v585 = vshrl.u32 %v584, 7
        %v586 = vsub.s32 %v583, %v585
        %v587 = vrot.slane %v579, %v586
        %v589 = vunpack.c.l.s4 1934713408
        %v590 = vunpack.c.0.s8 %v589
        %v591 = vlaneseq
        %v592 = vshrl.u32 %v591, 7
        %v593 = vsub.s32 %v590, %v592
        %v594 = vrot.slane %v580, %v593
        %v595 = vcombine.high %v571, 0.0
        %v596 = vcombine.high %v578, 0.0
        %v597 = vcombine.high %v587, 0.0
        %v598 = vcombine.high %v594, 0.0
        %600 = vrot.lane.b32.xlu0 %v595, 8
        %v601 = vpop.permute.xlu0 %600
        %604 = vrot.lane.b32.xlu0 %v578, 16
        %v605 = vpop.permute.xlu0 %604
        %608 = vrot.lane.b32.xlu0 %v596, 24
        %v609 = vpop.permute.xlu0 %608
        %612 = vrot.lane.b32.xlu0 %v587, 32
        %v613 = vpop.permute.xlu0 %612
        %616 = vrot.lane.b32.xlu0 %v597, 40
        %v617 = vpop.permute.xlu0 %616
        %620 = vrot.lane.b32.xlu0 %v594, 48
        %v621 = vpop.permute.xlu0 %620
        %624 = vrot.lane.b32.xlu0 %v598, 56
        %v625 = vpop.permute.xlu0 %624
        %v627 = vsel %vm418, %v571, %v601
        %vm628 = vcmask 130048
        %v629 = vsel %vm628, %v627, %v605
        %vm630 = vcmask 195584
        %v631 = vsel %vm630, %v629, %v609
        %vm632 = vcmask 261120
        %v633 = vsel %vm632, %v631, %v613
        %vm634 = vcmask 326656
        %v635 = vsel %vm634, %v633, %v617
        %vm636 = vcmask 392192
        %v637 = vsel %vm636, %v635, %v621
        %vm638 = vcmask 457728
        %v639 = vsel %vm638, %v637, %v625
        %s640 = scalar_lea.vmem [#allocation2], 8
        %v641 = vld [vmem:[%s640] ss:$2 sm:$0xff]
        %s642 = scalar_lea.vmem [#allocation2], 32
        %v643 = vld [vmem:[%s642] ss:$2 sm:$0xff]
        %s644 = scalar_lea.vmem %s1, 12
        %v645 = vld [vmem:[%s644] sm:$0xf]
        %v646 = vcombine.high %v641, 0.0
        %v648 = vunpack.c.l.s4 1983009808
        %v649 = vunpack.c.0.s8 %v648
        %v650 = vlaneseq
        %v651 = vshrl.u32 %v650, 7
        %v652 = vsub.s32 %v649, %v651
        %v653 = vrot.slane %v641, %v652
        %v655 = vunpack.c.l.s4 1983009808
        %v656 = vunpack.c.0.s8 %v655
        %v657 = vlaneseq
        %v658 = vshrl.u32 %v657, 7
        %v659 = vsub.s32 %v656, %v658
        %v660 = vrot.slane %v646, %v659
        %v661 = vcombine.high %v643, 0.0
        %v663 = vunpack.c.l.s4 1983009808
        %v664 = vunpack.c.0.s8 %v663
        %v665 = vlaneseq
        %v666 = vshrl.u32 %v665, 7
        %v667 = vsub.s32 %v664, %v666
        %v668 = vrot.slane %v643, %v667
        %v670 = vunpack.c.l.s4 1983009808
        %v671 = vunpack.c.0.s8 %v670
        %v672 = vlaneseq
        %v673 = vshrl.u32 %v672, 7
        %v674 = vsub.s32 %v671, %v673
        %v675 = vrot.slane %v661, %v674
        %v676 = vcombine.low %v653, %v668
        %v677 = vcombine.high %v653, %v668
        %v679 = vunpack.c.l.s4 1934713408
        %v680 = vunpack.c.0.s8 %v679
        %v681 = vlaneseq
        %v682 = vshrl.u32 %v681, 7
        %v683 = vsub.s32 %v680, %v682
        %v684 = vrot.slane %v676, %v683
        %v686 = vunpack.c.l.s4 1934713408
        %v687 = vunpack.c.0.s8 %v686
        %v688 = vlaneseq
        %v689 = vshrl.u32 %v688, 7
        %v690 = vsub.s32 %v687, %v689
        %v691 = vrot.slane %v677, %v690
        %v692 = vcombine.low %v660, %v675
        %v693 = vcombine.high %v660, %v675
        %v695 = vunpack.c.l.s4 1934713408
        %v696 = vunpack.c.0.s8 %v695
        %v697 = vlaneseq
        %v698 = vshrl.u32 %v697, 7
        %v699 = vsub.s32 %v696, %v698
        %v700 = vrot.slane %v692, %v699
        %v702 = vunpack.c.l.s4 1934713408
        %v703 = vunpack.c.0.s8 %v702
        %v704 = vlaneseq
        %v705 = vshrl.u32 %v704, 7
        %v706 = vsub.s32 %v703, %v705
        %v707 = vrot.slane %v693, %v706
        %v708 = vcombine.high %v684, 0.0
        %v709 = vcombine.high %v691, 0.0
        %v710 = vcombine.high %v700, 0.0
        %v711 = vcombine.high %v707, 0.0
        %713 = vrot.lane.b32.xlu0 %v708, 8
        %v714 = vpop.permute.xlu0 %713
        %717 = vrot.lane.b32.xlu0 %v691, 16
        %v718 = vpop.permute.xlu0 %717
        %721 = vrot.lane.b32.xlu0 %v709, 24
        %v722 = vpop.permute.xlu0 %721
        %725 = vrot.lane.b32.xlu0 %v700, 32
        %v726 = vpop.permute.xlu0 %725
        %729 = vrot.lane.b32.xlu0 %v710, 40
        %v730 = vpop.permute.xlu0 %729
        %733 = vrot.lane.b32.xlu0 %v707, 48
        %v734 = vpop.permute.xlu0 %733
        %737 = vrot.lane.b32.xlu0 %v711, 56
        %v738 = vpop.permute.xlu0 %737
        %v740 = vsel %vm418, %v684, %v714
        %v741 = vsel %vm628, %v740, %v718
        %v742 = vsel %vm630, %v741, %v722
        %v743 = vsel %vm632, %v742, %v726
        %v744 = vsel %vm634, %v743, %v730
        %v745 = vsel %vm636, %v744, %v734
        %v746 = vsel %vm638, %v745, %v738
        %vm747 = vcmask 15360
        %v749 = vsel %vm747, %v645, 0
        %vm751 = vcmask 1041408
        %v753 = vsel %vm751, %v746, 0
        %755 = vmatprep.subr.mxu0 0.0
        %756 = vmatpush1.msra.mxu0 %v753
        %757 = vmatprep.subr.mxu0 0.0
        %758 = vmatpush1.msra.mxu0 0.0
        %759 = vmatprep.subr.mxu0 0.0
        %760 = vmatpush1.msra.mxu0 0.0
        %761 = vmatprep.subr.mxu0 0.0
        %762 = vmatpush1.msra.mxu0 0.0
        %763 = vmatprep.subr.mxu0 0.0
        %764 = vmatpush1.msra.mxu0 0.0
        %765 = vmatprep.subr.mxu0 0.0
        %766 = vmatpush1.msra.mxu0 0.0
        %767 = vmatprep.subr.mxu0 0.0
        %768 = vmatpush1.msra.mxu0 0.0
        %769 = vmatprep.subr.mxu0 0.0
        %770 = vmatpush1.msra.mxu0 0.0
        %771 = vmatprep.subr.mxu0 0.0
        %772 = vmatpush1.msra.mxu0 0.0
        %773 = vmatprep.subr.mxu0 0.0
        %774 = vmatpush1.msra.mxu0 0.0
        %775 = vmatprep.subr.mxu0 0.0
        %776 = vmatpush1.msra.mxu0 0.0
        %777 = vmatprep.subr.mxu0 0.0
        %778 = vmatpush1.msra.mxu0 0.0
        %779 = vmatprep.subr.mxu0 0.0
        %780 = vmatpush1.msra.mxu0 0.0
        %781 = vmatprep.subr.mxu0 0.0
        %782 = vmatpush1.msra.mxu0 0.0
        %783 = vmatprep.subr.mxu0 0.0
        %784 = vmatpush1.msra.mxu0 0.0
        %785 = vmatprep.subr.mxu0 0.0
        %786 = vmatpush1.msra.mxu0 0.0
        %787 = vmatprep.subr.mxu0 0.0
        %788 = vmatpush1.msra.mxu0 0.0
        %789 = vmatprep.subr.mxu0 0.0
        %790 = vmatpush1.msra.mxu0 0.0
        %791 = vmatprep.subr.mxu0 0.0
        %792 = vmatpush1.msra.mxu0 0.0
        %793 = vmatprep.subr.mxu0 0.0
        %794 = vmatpush1.msra.mxu0 0.0
        %795 = vmatprep.subr.mxu0 0.0
        %796 = vmatpush1.msra.mxu0 0.0
        %797 = vmatprep.subr.mxu0 0.0
        %798 = vmatpush1.msra.mxu0 0.0
        %799 = vmatprep.subr.mxu0 0.0
        %800 = vmatpush1.msra.mxu0 0.0
        %801 = vmatprep.subr.mxu0 0.0
        %802 = vmatpush1.msra.mxu0 0.0
        %803 = vmatprep.subr.mxu0 0.0
        %804 = vmatpush1.msra.mxu0 0.0
        %805 = vmatprep.subr.mxu0 0.0
        %806 = vmatpush1.msra.mxu0 0.0
        %807 = vmatprep.subr.mxu0 0.0
        %808 = vmatpush1.msra.mxu0 0.0
        %809 = vmatprep.subr.mxu0 0.0
        %810 = vmatpush1.msra.mxu0 0.0
        %811 = vmatprep.subr.mxu0 0.0
        %812 = vmatpush1.msra.mxu0 0.0
        %813 = vmatprep.subr.mxu0 0.0
        %814 = vmatpush1.msra.mxu0 0.0
        %815 = vmatprep.subr.mxu0 0.0
        %816 = vmatpush1.msra.mxu0 0.0
        %817 = vmatprep.subr.mxu0 0.0
        %818 = vmatpush1.msra.mxu0 0.0
        %819 = vmatprep.mubr.f32.mxu0 0.0
        %820 = vmatmul.mubr.f32.gmra.mrb[0].mxu0 %v749
        %v821 = vpop.f32.mrb[0].mxu0
        %v822 = vadd.f32 0.0, %v821
        %v823 = vpop.f32.mrb[0].mxu0
        %824 = vdwg.mxu0
        %v826 = vsel %vm747, %v532, 0
        %v829 = vsel %vm751, %v639, 0
        %831 = vmatprep.subr.mxu0 0.0
        %832 = vmatpush1.msra.mxu0 %v829
        %833 = vmatprep.subr.mxu0 0.0
        %834 = vmatpush1.msra.mxu0 0.0
        %835 = vmatprep.subr.mxu0 0.0
        %836 = vmatpush1.msra.mxu0 0.0
        %837 = vmatprep.subr.mxu0 0.0
        %838 = vmatpush1.msra.mxu0 0.0
        %839 = vmatprep.subr.mxu0 0.0
        %840 = vmatpush1.msra.mxu0 0.0
        %841 = vmatprep.subr.mxu0 0.0
        %842 = vmatpush1.msra.mxu0 0.0
        %843 = vmatprep.subr.mxu0 0.0
        %844 = vmatpush1.msra.mxu0 0.0
        %845 = vmatprep.subr.mxu0 0.0
        %846 = vmatpush1.msra.mxu0 0.0
        %847 = vmatprep.subr.mxu0 0.0
        %848 = vmatpush1.msra.mxu0 0.0
        %849 = vmatprep.subr.mxu0 0.0
        %850 = vmatpush1.msra.mxu0 0.0
        %851 = vmatprep.subr.mxu0 0.0
        %852 = vmatpush1.msra.mxu0 0.0
        %853 = vmatprep.subr.mxu0 0.0
        %854 = vmatpush1.msra.mxu0 0.0
        %855 = vmatprep.subr.mxu0 0.0
        %856 = vmatpush1.msra.mxu0 0.0
        %857 = vmatprep.subr.mxu0 0.0
        %858 = vmatpush1.msra.mxu0 0.0
        %859 = vmatprep.subr.mxu0 0.0
        %860 = vmatpush1.msra.mxu0 0.0
        %861 = vmatprep.subr.mxu0 0.0
        %862 = vmatpush1.msra.mxu0 0.0
        %863 = vmatprep.subr.mxu0 0.0
        %864 = vmatpush1.msra.mxu0 0.0
        %865 = vmatprep.subr.mxu0 0.0
        %866 = vmatpush1.msra.mxu0 0.0
        %867 = vmatprep.subr.mxu0 0.0
        %868 = vmatpush1.msra.mxu0 0.0
        %869 = vmatprep.subr.mxu0 0.0
        %870 = vmatpush1.msra.mxu0 0.0
        %871 = vmatprep.subr.mxu0 0.0
        %872 = vmatpush1.msra.mxu0 0.0
        %873 = vmatprep.subr.mxu0 0.0
        %874 = vmatpush1.msra.mxu0 0.0
        %875 = vmatprep.subr.mxu0 0.0
        %876 = vmatpush1.msra.mxu0 0.0
        %877 = vmatprep.subr.mxu0 0.0
        %878 = vmatpush1.msra.mxu0 0.0
        %879 = vmatprep.subr.mxu0 0.0
        %880 = vmatpush1.msra.mxu0 0.0
        %881 = vmatprep.subr.mxu0 0.0
        %882 = vmatpush1.msra.mxu0 0.0
        %883 = vmatprep.subr.mxu0 0.0
        %884 = vmatpush1.msra.mxu0 0.0
        %885 = vmatprep.subr.mxu0 0.0
        %886 = vmatpush1.msra.mxu0 0.0
        %887 = vmatprep.subr.mxu0 0.0
        %888 = vmatpush1.msra.mxu0 0.0
        %889 = vmatprep.subr.mxu0 0.0
        %890 = vmatpush1.msra.mxu0 0.0
        %891 = vmatprep.subr.mxu0 0.0
        %892 = vmatpush1.msra.mxu0 0.0
        %893 = vmatprep.subr.mxu0 0.0
        %894 = vmatpush1.msra.mxu0 0.0
        %895 = vmatprep.mubr.f32.mxu0 0.0
        %896 = vmatmul.mubr.f32.gmra.mrb[0].mxu0 %v826
        %v897 = vpop.f32.mrb[0].mxu0
        %v898 = vadd.f32 %v822, %v897
        %v899 = vpop.f32.mrb[0].mxu0
        %900 = vdwg.mxu0
        %s901 = scalar_lea.vmem [#allocation2], 9
        %v902 = vld [vmem:[%s901] ss:$2 sm:$0xff]
        %s903 = scalar_lea.vmem [#allocation2], 33
        %v904 = vld [vmem:[%s903] ss:$2 sm:$0xff]
        %s905 = scalar_lea.vmem %s1, 24
        %v906 = vld [vmem:[%s905] sm:$0xf]
        %v907 = vcombine.high %v902, 0.0
        %v909 = vunpack.c.l.s4 1983009808
        %v910 = vunpack.c.0.s8 %v909
        %v911 = vlaneseq
        %v912 = vshrl.u32 %v911, 7
        %v913 = vsub.s32 %v910, %v912
        %v914 = vrot.slane %v902, %v913
        %v916 = vunpack.c.l.s4 1983009808
        %v917 = vunpack.c.0.s8 %v916
        %v918 = vlaneseq
        %v919 = vshrl.u32 %v918, 7
        %v920 = vsub.s32 %v917, %v919
        %v921 = vrot.slane %v907, %v920
        %v922 = vcombine.high %v904, 0.0
        %v924 = vunpack.c.l.s4 1983009808
        %v925 = vunpack.c.0.s8 %v924
        %v926 = vlaneseq
        %v927 = vshrl.u32 %v926, 7
        %v928 = vsub.s32 %v925, %v927
        %v929 = vrot.slane %v904, %v928
        %v931 = vunpack.c.l.s4 1983009808
        %v932 = vunpack.c.0.s8 %v931
        %v933 = vlaneseq
        %v934 = vshrl.u32 %v933, 7
        %v935 = vsub.s32 %v932, %v934
        %v936 = vrot.slane %v922, %v935
        %v937 = vcombine.low %v914, %v929
        %v938 = vcombine.high %v914, %v929
        %v940 = vunpack.c.l.s4 1934713408
        %v941 = vunpack.c.0.s8 %v940
        %v942 = vlaneseq
        %v943 = vshrl.u32 %v942, 7
        %v944 = vsub.s32 %v941, %v943
        %v945 = vrot.slane %v937, %v944
        %v947 = vunpack.c.l.s4 1934713408
        %v948 = vunpack.c.0.s8 %v947
        %v949 = vlaneseq
        %v950 = vshrl.u32 %v949, 7
        %v951 = vsub.s32 %v948, %v950
        %v952 = vrot.slane %v938, %v951
        %v953 = vcombine.low %v921, %v936
        %v954 = vcombine.high %v921, %v936
        %v956 = vunpack.c.l.s4 1934713408
        %v957 = vunpack.c.0.s8 %v956
        %v958 = vlaneseq
        %v959 = vshrl.u32 %v958, 7
        %v960 = vsub.s32 %v957, %v959
        %v961 = vrot.slane %v953, %v960
        %v963 = vunpack.c.l.s4 1934713408
        %v964 = vunpack.c.0.s8 %v963
        %v965 = vlaneseq
        %v966 = vshrl.u32 %v965, 7
        %v967 = vsub.s32 %v964, %v966
        %v968 = vrot.slane %v954, %v967
        %v969 = vcombine.high %v945, 0.0
        %v970 = vcombine.high %v952, 0.0
        %v971 = vcombine.high %v961, 0.0
        %v972 = vcombine.high %v968, 0.0
        %974 = vrot.lane.b32.xlu0 %v969, 8
        %v975 = vpop.permute.xlu0 %974
        %978 = vrot.lane.b32.xlu0 %v952, 16
        %v979 = vpop.permute.xlu0 %978
        %982 = vrot.lane.b32.xlu0 %v970, 24
        %v983 = vpop.permute.xlu0 %982
        %986 = vrot.lane.b32.xlu0 %v961, 32
        %v987 = vpop.permute.xlu0 %986
        %990 = vrot.lane.b32.xlu0 %v971, 40
        %v991 = vpop.permute.xlu0 %990
        %994 = vrot.lane.b32.xlu0 %v968, 48
        %v995 = vpop.permute.xlu0 %994
        %998 = vrot.lane.b32.xlu0 %v972, 56
        %v999 = vpop.permute.xlu0 %998
        %v1001 = vsel %vm418, %v945, %v975
        %v1002 = vsel %vm628, %v1001, %v979
        %v1003 = vsel %vm630, %v1002, %v983
        %v1004 = vsel %vm632, %v1003, %v987
        %v1005 = vsel %vm634, %v1004, %v991
        %v1006 = vsel %vm636, %v1005, %v995
        %v1007 = vsel %vm638, %v1006, %v999
        %v1009 = vsel %vm747, %v906, 0
        %v1012 = vsel %vm751, %v1007, 0
        %1014 = vmatprep.subr.mxu0 0.0
        %1015 = vmatpush1.msra.mxu0 %v1012
        %1016 = vmatprep.subr.mxu0 0.0
        %1017 = vmatpush1.msra.mxu0 0.0
        %1018 = vmatprep.subr.mxu0 0.0
        %1019 = vmatpush1.msra.mxu0 0.0
        %1020 = vmatprep.subr.mxu0 0.0
        %1021 = vmatpush1.msra.mxu0 0.0
        %1022 = vmatprep.subr.mxu0 0.0
        %1023 = vmatpush1.msra.mxu0 0.0
        %1024 = vmatprep.subr.mxu0 0.0
        %1025 = vmatpush1.msra.mxu0 0.0
        %1026 = vmatprep.subr.mxu0 0.0
        %1027 = vmatpush1.msra.mxu0 0.0
        %1028 = vmatprep.subr.mxu0 0.0
        %1029 = vmatpush1.msra.mxu0 0.0
        %1030 = vmatprep.subr.mxu0 0.0
        %1031 = vmatpush1.msra.mxu0 0.0
        %1032 = vmatprep.subr.mxu0 0.0
        %1033 = vmatpush1.msra.mxu0 0.0
        %1034 = vmatprep.subr.mxu0 0.0
        %1035 = vmatpush1.msra.mxu0 0.0
        %1036 = vmatprep.subr.mxu0 0.0
        %1037 = vmatpush1.msra.mxu0 0.0
        %1038 = vmatprep.subr.mxu0 0.0
        %1039 = vmatpush1.msra.mxu0 0.0
        %1040 = vmatprep.subr.mxu0 0.0
        %1041 = vmatpush1.msra.mxu0 0.0
        %1042 = vmatprep.subr.mxu0 0.0
        %1043 = vmatpush1.msra.mxu0 0.0
        %1044 = vmatprep.subr.mxu0 0.0
        %1045 = vmatpush1.msra.mxu0 0.0
        %1046 = vmatprep.subr.mxu0 0.0
        %1047 = vmatpush1.msra.mxu0 0.0
        %1048 = vmatprep.subr.mxu0 0.0
        %1049 = vmatpush1.msra.mxu0 0.0
        %1050 = vmatprep.subr.mxu0 0.0
        %1051 = vmatpush1.msra.mxu0 0.0
        %1052 = vmatprep.subr.mxu0 0.0
        %1053 = vmatpush1.msra.mxu0 0.0
        %1054 = vmatprep.subr.mxu0 0.0
        %1055 = vmatpush1.msra.mxu0 0.0
        %1056 = vmatprep.subr.mxu0 0.0
        %1057 = vmatpush1.msra.mxu0 0.0
        %1058 = vmatprep.subr.mxu0 0.0
        %1059 = vmatpush1.msra.mxu0 0.0
        %1060 = vmatprep.subr.mxu0 0.0
        %1061 = vmatpush1.msra.mxu0 0.0
        %1062 = vmatprep.subr.mxu0 0.0
        %1063 = vmatpush1.msra.mxu0 0.0
        %1064 = vmatprep.subr.mxu0 0.0
        %1065 = vmatpush1.msra.mxu0 0.0
        %1066 = vmatprep.subr.mxu0 0.0
        %1067 = vmatpush1.msra.mxu0 0.0
        %1068 = vmatprep.subr.mxu0 0.0
        %1069 = vmatpush1.msra.mxu0 0.0
        %1070 = vmatprep.subr.mxu0 0.0
        %1071 = vmatpush1.msra.mxu0 0.0
        %1072 = vmatprep.subr.mxu0 0.0
        %1073 = vmatpush1.msra.mxu0 0.0
        %1074 = vmatprep.subr.mxu0 0.0
        %1075 = vmatpush1.msra.mxu0 0.0
        %1076 = vmatprep.subr.mxu0 0.0
        %1077 = vmatpush1.msra.mxu0 0.0
        %1078 = vmatprep.mubr.f32.mxu0 0.0
        %1079 = vmatmul.mubr.f32.gmra.mrb[0].mxu0 %v1009
        %v1080 = vpop.f32.mrb[0].mxu0
        %v1081 = vadd.f32 0.0, %v1080
        %v1082 = vpop.f32.mrb[0].mxu0
        %1083 = vdwg.mxu0
        %v1084 = vadd.f32 %v898, %v1081
        %s1085 = scalar_lea.vmem %s5, 16
        %v1086 = vld [vmem:[%s1085] sm:$0xff]
        %v1087 = vld [vmem:[%s1085 + $0x8] sm:$0x7f]
        %v1089 = vsel %vm313, %v1087, 0
        %1091 = vmatprep.subr.mxu0 0.0
        %1092 = vmatpush1.msra.mxu0 %v1086
        %1093 = vmatprep.subr.mxu0 0.0
        %1094 = vmatpush1.msra.mxu0 %v1089
        %1095 = vmatprep.subr.mxu0 0.0
        %1096 = vmatpush1.msra.mxu0 0.0
        %1097 = vmatprep.subr.mxu0 0.0
        %1098 = vmatpush1.msra.mxu0 0.0
        %1099 = vmatprep.subr.mxu0 0.0
        %1100 = vmatpush1.msra.mxu0 0.0
        %1101 = vmatprep.subr.mxu0 0.0
        %1102 = vmatpush1.msra.mxu0 0.0
        %1103 = vmatprep.subr.mxu0 0.0
        %1104 = vmatpush1.msra.mxu0 0.0
        %1105 = vmatprep.subr.mxu0 0.0
        %1106 = vmatpush1.msra.mxu0 0.0
        %1107 = vmatprep.subr.mxu0 0.0
        %1108 = vmatpush1.msra.mxu0 0.0
        %1109 = vmatprep.subr.mxu0 0.0
        %1110 = vmatpush1.msra.mxu0 0.0
        %1111 = vmatprep.subr.mxu0 0.0
        %1112 = vmatpush1.msra.mxu0 0.0
        %1113 = vmatprep.subr.mxu0 0.0
        %1114 = vmatpush1.msra.mxu0 0.0
        %1115 = vmatprep.subr.mxu0 0.0
        %1116 = vmatpush1.msra.mxu0 0.0
        %1117 = vmatprep.subr.mxu0 0.0
        %1118 = vmatpush1.msra.mxu0 0.0
        %1119 = vmatprep.subr.mxu0 0.0
        %1120 = vmatpush1.msra.mxu0 0.0
        %1121 = vmatprep.subr.mxu0 0.0
        %1122 = vmatpush1.msra.mxu0 0.0
        %1123 = vmatprep.subr.mxu0 0.0
        %1124 = vmatpush1.msra.mxu0 0.0
        %1125 = vmatprep.subr.mxu0 0.0
        %1126 = vmatpush1.msra.mxu0 0.0
        %1127 = vmatprep.subr.mxu0 0.0
        %1128 = vmatpush1.msra.mxu0 0.0
        %1129 = vmatprep.subr.mxu0 0.0
        %1130 = vmatpush1.msra.mxu0 0.0
        %1131 = vmatprep.subr.mxu0 0.0
        %1132 = vmatpush1.msra.mxu0 0.0
        %1133 = vmatprep.subr.mxu0 0.0
        %1134 = vmatpush1.msra.mxu0 0.0
        %1135 = vmatprep.subr.mxu0 0.0
        %1136 = vmatpush1.msra.mxu0 0.0
        %1137 = vmatprep.subr.mxu0 0.0
        %1138 = vmatpush1.msra.mxu0 0.0
        %1139 = vmatprep.subr.mxu0 0.0
        %1140 = vmatpush1.msra.mxu0 0.0
        %1141 = vmatprep.subr.mxu0 0.0
        %1142 = vmatpush1.msra.mxu0 0.0
        %1143 = vmatprep.subr.mxu0 0.0
        %1144 = vmatpush1.msra.mxu0 0.0
        %1145 = vmatprep.subr.mxu0 0.0
        %1146 = vmatpush1.msra.mxu0 0.0
        %1147 = vmatprep.subr.mxu0 0.0
        %1148 = vmatpush1.msra.mxu0 0.0
        %1149 = vmatprep.subr.mxu0 0.0
        %1150 = vmatpush1.msra.mxu0 0.0
        %1151 = vmatprep.subr.mxu0 0.0
        %1152 = vmatpush1.msra.mxu0 0.0
        %1153 = vmatprep.subr.mxu0 0.0
        %1154 = vmatpush1.msra.mxu0 0.0
        %1155 = vmatprep.mubr.f32.mxu0 0.0
        %1156 = vmatmul.mubr.f32.gmra.mrb[0].mxu0 %v425
        %v1157 = vpop.f32.mrb[0].mxu0
        %v1158 = vadd.f32 0.0, %v1157
        %v1159 = vpop.f32.mrb[0].mxu0
        %1160 = vmatprep.mubr.f32.mxu0 0.0
        %1161 = vmatmul.mubr.f32.gmra.mrb[0].mxu0 %v428
        %v1162 = vpop.f32.mrb[0].mxu0
        %v1163 = vadd.f32 0.0, %v1162
        %v1164 = vpop.f32.mrb[0].mxu0
        %1165 = vmatprep.mubr.f32.mxu0 0.0
        %1166 = vmatmul.mubr.f32.gmra.mrb[0].mxu0 %v431
        %v1167 = vpop.f32.mrb[0].mxu0
        %v1168 = vadd.f32 0.0, %v1167
        %v1169 = vpop.f32.mrb[0].mxu0
        %1170 = vmatprep.mubr.f32.mxu0 0.0
        %1171 = vmatmul.mubr.f32.gmra.mrb[0].mxu0 %v434
        %v1172 = vpop.f32.mrb[0].mxu0
        %v1173 = vadd.f32 0.0, %v1172
        %v1174 = vpop.f32.mrb[0].mxu0
        %1175 = vdwg.mxu0
        %1176 = vst.msk [vmem:[#allocation2 + $0x8] sm:$0xff] %vm418, %v1158
        %1177 = vst.msk [vmem:[#allocation2 + $0x10] sm:$0xff] %vm418, %v1163
        %1178 = vst.msk [vmem:[#allocation2 + $0x20] sm:$0xff] %vm418, %v1168
        %1179 = vst.msk [vmem:[#allocation2 + $0x28] sm:$0xff] %vm418, %v1173
        %v1180 = vld [vmem:[%s528] ss:$2 sm:$0xff]
        %v1181 = vld [vmem:[%s530] ss:$2 sm:$0xff]
        %s1182 = scalar_lea.vmem %s1, 4
        %v1183 = vld [vmem:[%s1182] sm:$0xf]
        %v1184 = vcombine.high %v1180, 0.0
        %v1186 = vunpack.c.l.s4 1983009808
        %v1187 = vunpack.c.0.s8 %v1186
        %v1188 = vlaneseq
        %v1189 = vshrl.u32 %v1188, 7
        %v1190 = vsub.s32 %v1187, %v1189
        %v1191 = vrot.slane %v1180, %v1190
        %v1193 = vunpack.c.l.s4 1983009808
        %v1194 = vunpack.c.0.s8 %v1193
        %v1195 = vlaneseq
        %v1196 = vshrl.u32 %v1195, 7
        %v1197 = vsub.s32 %v1194, %v1196
        %v1198 = vrot.slane %v1184, %v1197
        %v1199 = vcombine.high %v1181, 0.0
        %v1201 = vunpack.c.l.s4 1983009808
        %v1202 = vunpack.c.0.s8 %v1201
        %v1203 = vlaneseq
        %v1204 = vshrl.u32 %v1203, 7
        %v1205 = vsub.s32 %v1202, %v1204
        %v1206 = vrot.slane %v1181, %v1205
        %v1208 = vunpack.c.l.s4 1983009808
        %v1209 = vunpack.c.0.s8 %v1208
        %v1210 = vlaneseq
        %v1211 = vshrl.u32 %v1210, 7
        %v1212 = vsub.s32 %v1209, %v1211
        %v1213 = vrot.slane %v1199, %v1212
        %v1214 = vcombine.low %v1191, %v1206
        %v1215 = vcombine.high %v1191, %v1206
        %v1217 = vunpack.c.l.s4 1934713408
        %v1218 = vunpack.c.0.s8 %v1217
        %v1219 = vlaneseq
        %v1220 = vshrl.u32 %v1219, 7
        %v1221 = vsub.s32 %v1218, %v1220
        %v1222 = vrot.slane %v1214, %v1221
        %v1224 = vunpack.c.l.s4 1934713408
        %v1225 = vunpack.c.0.s8 %v1224
        %v1226 = vlaneseq
        %v1227 = vshrl.u32 %v1226, 7
        %v1228 = vsub.s32 %v1225, %v1227
        %v1229 = vrot.slane %v1215, %v1228
        %v1230 = vcombine.low %v1198, %v1213
        %v1231 = vcombine.high %v1198, %v1213
        %v1233 = vunpack.c.l.s4 1934713408
        %v1234 = vunpack.c.0.s8 %v1233
        %v1235 = vlaneseq
        %v1236 = vshrl.u32 %v1235, 7
        %v1237 = vsub.s32 %v1234, %v1236
        %v1238 = vrot.slane %v1230, %v1237
        %v1240 = vunpack.c.l.s4 1934713408
        %v1241 = vunpack.c.0.s8 %v1240
        %v1242 = vlaneseq
        %v1243 = vshrl.u32 %v1242, 7
        %v1244 = vsub.s32 %v1241, %v1243
        %v1245 = vrot.slane %v1231, %v1244
        %v1246 = vcombine.high %v1222, 0.0
        %v1247 = vcombine.high %v1229, 0.0
        %v1248 = vcombine.high %v1238, 0.0
        %v1249 = vcombine.high %v1245, 0.0
        %1251 = vrot.lane.b32.xlu0 %v1246, 8
        %v1252 = vpop.permute.xlu0 %1251
        %1255 = vrot.lane.b32.xlu0 %v1229, 16
        %v1256 = vpop.permute.xlu0 %1255
        %1259 = vrot.lane.b32.xlu0 %v1247, 24
        %v1260 = vpop.permute.xlu0 %1259
        %1263 = vrot.lane.b32.xlu0 %v1238, 32
        %v1264 = vpop.permute.xlu0 %1263
        %1267 = vrot.lane.b32.xlu0 %v1248, 40
        %v1268 = vpop.permute.xlu0 %1267
        %1271 = vrot.lane.b32.xlu0 %v1245, 48
        %v1272 = vpop.permute.xlu0 %1271
        %1275 = vrot.lane.b32.xlu0 %v1249, 56
        %v1276 = vpop.permute.xlu0 %1275
        %v1278 = vsel %vm418, %v1222, %v1252
        %v1279 = vsel %vm628, %v1278, %v1256
        %v1280 = vsel %vm630, %v1279, %v1260
        %v1281 = vsel %vm632, %v1280, %v1264
        %v1282 = vsel %vm634, %v1281, %v1268
        %v1283 = vsel %vm636, %v1282, %v1272
        %v1284 = vsel %vm638, %v1283, %v1276
        %v1286 = vsel %vm747, %v1183, 0
        %v1289 = vsel %vm751, %v1284, 0
        %1291 = vmatprep.subr.mxu0 0.0
        %1292 = vmatpush1.msra.mxu0 %v1289
        %1293 = vmatprep.subr.mxu0 0.0
        %1294 = vmatpush1.msra.mxu0 0.0
        %1295 = vmatprep.subr.mxu0 0.0
        %1296 = vmatpush1.msra.mxu0 0.0
        %1297 = vmatprep.subr.mxu0 0.0
        %1298 = vmatpush1.msra.mxu0 0.0
        %1299 = vmatprep.subr.mxu0 0.0
        %1300 = vmatpush1.msra.mxu0 0.0
        %1301 = vmatprep.subr.mxu0 0.0
        %1302 = vmatpush1.msra.mxu0 0.0
        %1303 = vmatprep.subr.mxu0 0.0
        %1304 = vmatpush1.msra.mxu0 0.0
        %1305 = vmatprep.subr.mxu0 0.0
        %1306 = vmatpush1.msra.mxu0 0.0
        %1307 = vmatprep.subr.mxu0 0.0
        %1308 = vmatpush1.msra.mxu0 0.0
        %1309 = vmatprep.subr.mxu0 0.0
        %1310 = vmatpush1.msra.mxu0 0.0
        %1311 = vmatprep.subr.mxu0 0.0
        %1312 = vmatpush1.msra.mxu0 0.0
        %1313 = vmatprep.subr.mxu0 0.0
        %1314 = vmatpush1.msra.mxu0 0.0
        %1315 = vmatprep.subr.mxu0 0.0
        %1316 = vmatpush1.msra.mxu0 0.0
        %1317 = vmatprep.subr.mxu0 0.0
        %1318 = vmatpush1.msra.mxu0 0.0
        %1319 = vmatprep.subr.mxu0 0.0
        %1320 = vmatpush1.msra.mxu0 0.0
        %1321 = vmatprep.subr.mxu0 0.0
        %1322 = vmatpush1.msra.mxu0 0.0
        %1323 = vmatprep.subr.mxu0 0.0
        %1324 = vmatpush1.msra.mxu0 0.0
        %1325 = vmatprep.subr.mxu0 0.0
        %1326 = vmatpush1.msra.mxu0 0.0
        %1327 = vmatprep.subr.mxu0 0.0
        %1328 = vmatpush1.msra.mxu0 0.0
        %1329 = vmatprep.subr.mxu0 0.0
        %1330 = vmatpush1.msra.mxu0 0.0
        %1331 = vmatprep.subr.mxu0 0.0
        %1332 = vmatpush1.msra.mxu0 0.0
        %1333 = vmatprep.subr.mxu0 0.0
        %1334 = vmatpush1.msra.mxu0 0.0
        %1335 = vmatprep.subr.mxu0 0.0
        %1336 = vmatpush1.msra.mxu0 0.0
        %1337 = vmatprep.subr.mxu0 0.0
        %1338 = vmatpush1.msra.mxu0 0.0
        %1339 = vmatprep.subr.mxu0 0.0
        %1340 = vmatpush1.msra.mxu0 0.0
        %1341 = vmatprep.subr.mxu0 0.0
        %1342 = vmatpush1.msra.mxu0 0.0
        %1343 = vmatprep.subr.mxu0 0.0
        %1344 = vmatpush1.msra.mxu0 0.0
        %1345 = vmatprep.subr.mxu0 0.0
        %1346 = vmatpush1.msra.mxu0 0.0
        %1347 = vmatprep.subr.mxu0 0.0
        %1348 = vmatpush1.msra.mxu0 0.0
        %1349 = vmatprep.subr.mxu0 0.0
        %1350 = vmatpush1.msra.mxu0 0.0
        %1351 = vmatprep.subr.mxu0 0.0
        %1352 = vmatpush1.msra.mxu0 0.0
        %1353 = vmatprep.subr.mxu0 0.0
        %1354 = vmatpush1.msra.mxu0 0.0
        %1355 = vmatprep.mubr.f32.mxu0 0.0
        %1356 = vmatmul.mubr.f32.gmra.mrb[0].mxu0 %v1286
        %v1357 = vpop.f32.mrb[0].mxu0
        %v1358 = vadd.f32 0.0, %v1357
        %v1359 = vpop.f32.mrb[0].mxu0
        %1360 = vdwg.mxu0
        %v1361 = vadd.f32 %v1084, %v1358
        %v1362 = vld [vmem:[%s640] ss:$2 sm:$0xff]
        %v1363 = vld [vmem:[%s642] ss:$2 sm:$0xff]
        %s1364 = scalar_lea.vmem %s1, 16
        %v1365 = vld [vmem:[%s1364] sm:$0xf]
        %v1366 = vcombine.high %v1362, 0.0
        %v1368 = vunpack.c.l.s4 1983009808
        %v1369 = vunpack.c.0.s8 %v1368
        %v1370 = vlaneseq
        %v1371 = vshrl.u32 %v1370, 7
        %v1372 = vsub.s32 %v1369, %v1371
        %v1373 = vrot.slane %v1362, %v1372
        %v1375 = vunpack.c.l.s4 1983009808
        %v1376 = vunpack.c.0.s8 %v1375
        %v1377 = vlaneseq
        %v1378 = vshrl.u32 %v1377, 7
        %v1379 = vsub.s32 %v1376, %v1378
        %v1380 = vrot.slane %v1366, %v1379
        %v1381 = vcombine.high %v1363, 0.0
        %v1383 = vunpack.c.l.s4 1983009808
        %v1384 = vunpack.c.0.s8 %v1383
        %v1385 = vlaneseq
        %v1386 = vshrl.u32 %v1385, 7
        %v1387 = vsub.s32 %v1384, %v1386
        %v1388 = vrot.slane %v1363, %v1387
        %v1390 = vunpack.c.l.s4 1983009808
        %v1391 = vunpack.c.0.s8 %v1390
        %v1392 = vlaneseq
        %v1393 = vshrl.u32 %v1392, 7
        %v1394 = vsub.s32 %v1391, %v1393
        %v1395 = vrot.slane %v1381, %v1394
        %v1396 = vcombine.low %v1373, %v1388
        %v1397 = vcombine.high %v1373, %v1388
        %v1399 = vunpack.c.l.s4 1934713408
        %v1400 = vunpack.c.0.s8 %v1399
        %v1401 = vlaneseq
        %v1402 = vshrl.u32 %v1401, 7
        %v1403 = vsub.s32 %v1400, %v1402
        %v1404 = vrot.slane %v1396, %v1403
        %v1406 = vunpack.c.l.s4 1934713408
        %v1407 = vunpack.c.0.s8 %v1406
        %v1408 = vlaneseq
        %v1409 = vshrl.u32 %v1408, 7
        %v1410 = vsub.s32 %v1407, %v1409
        %v1411 = vrot.slane %v1397, %v1410
        %v1412 = vcombine.low %v1380, %v1395
        %v1413 = vcombine.high %v1380, %v1395
        %v1415 = vunpack.c.l.s4 1934713408
        %v1416 = vunpack.c.0.s8 %v1415
        %v1417 = vlaneseq
        %v1418 = vshrl.u32 %v1417, 7
        %v1419 = vsub.s32 %v1416, %v1418
        %v1420 = vrot.slane %v1412, %v1419
        %v1422 = vunpack.c.l.s4 1934713408
        %v1423 = vunpack.c.0.s8 %v1422
        %v1424 = vlaneseq
        %v1425 = vshrl.u32 %v1424, 7
        %v1426 = vsub.s32 %v1423, %v1425
        %v1427 = vrot.slane %v1413, %v1426
        %v1428 = vcombine.high %v1404, 0.0
        %v1429 = vcombine.high %v1411, 0.0
        %v1430 = vcombine.high %v1420, 0.0
        %v1431 = vcombine.high %v1427, 0.0
        %1433 = vrot.lane.b32.xlu0 %v1428, 8
        %v1434 = vpop.permute.xlu0 %1433
        %1437 = vrot.lane.b32.xlu0 %v1411, 16
        %v1438 = vpop.permute.xlu0 %1437
        %1441 = vrot.lane.b32.xlu0 %v1429, 24
        %v1442 = vpop.permute.xlu0 %1441
        %1445 = vrot.lane.b32.xlu0 %v1420, 32
        %v1446 = vpop.permute.xlu0 %1445
        %1449 = vrot.lane.b32.xlu0 %v1430, 40
        %v1450 = vpop.permute.xlu0 %1449
        %1453 = vrot.lane.b32.xlu0 %v1427, 48
        %v1454 = vpop.permute.xlu0 %1453
        %1457 = vrot.lane.b32.xlu0 %v1431, 56
        %v1458 = vpop.permute.xlu0 %1457
        %v1460 = vsel %vm418, %v1404, %v1434
        %v1461 = vsel %vm628, %v1460, %v1438
        %v1462 = vsel %vm630, %v1461, %v1442
        %v1463 = vsel %vm632, %v1462, %v1446
        %v1464 = vsel %vm634, %v1463, %v1450
        %v1465 = vsel %vm636, %v1464, %v1454
        %v1466 = vsel %vm638, %v1465, %v1458
        %v1468 = vsel %vm747, %v1365, 0
        %v1471 = vsel %vm751, %v1466, 0
        %1473 = vmatprep.subr.mxu0 0.0
        %1474 = vmatpush1.msra.mxu0 %v1471
        %1475 = vmatprep.subr.mxu0 0.0
        %1476 = vmatpush1.msra.mxu0 0.0
        %1477 = vmatprep.subr.mxu0 0.0
        %1478 = vmatpush1.msra.mxu0 0.0
        %1479 = vmatprep.subr.mxu0 0.0
        %1480 = vmatpush1.msra.mxu0 0.0
        %1481 = vmatprep.subr.mxu0 0.0
        %1482 = vmatpush1.msra.mxu0 0.0
        %1483 = vmatprep.subr.mxu0 0.0
        %1484 = vmatpush1.msra.mxu0 0.0
        %1485 = vmatprep.subr.mxu0 0.0
        %1486 = vmatpush1.msra.mxu0 0.0
        %1487 = vmatprep.subr.mxu0 0.0
        %1488 = vmatpush1.msra.mxu0 0.0
        %1489 = vmatprep.subr.mxu0 0.0
        %1490 = vmatpush1.msra.mxu0 0.0
        %1491 = vmatprep.subr.mxu0 0.0
        %1492 = vmatpush1.msra.mxu0 0.0
        %1493 = vmatprep.subr.mxu0 0.0
        %1494 = vmatpush1.msra.mxu0 0.0
        %1495 = vmatprep.subr.mxu0 0.0
        %1496 = vmatpush1.msra.mxu0 0.0
        %1497 = vmatprep.subr.mxu0 0.0
        %1498 = vmatpush1.msra.mxu0 0.0
        %1499 = vmatprep.subr.mxu0 0.0
        %1500 = vmatpush1.msra.mxu0 0.0
        %1501 = vmatprep.subr.mxu0 0.0
        %1502 = vmatpush1.msra.mxu0 0.0
        %1503 = vmatprep.subr.mxu0 0.0
        %1504 = vmatpush1.msra.mxu0 0.0
        %1505 = vmatprep.subr.mxu0 0.0
        %1506 = vmatpush1.msra.mxu0 0.0
        %1507 = vmatprep.subr.mxu0 0.0
        %1508 = vmatpush1.msra.mxu0 0.0
        %1509 = vmatprep.subr.mxu0 0.0
        %1510 = vmatpush1.msra.mxu0 0.0
        %1511 = vmatprep.subr.mxu0 0.0
        %1512 = vmatpush1.msra.mxu0 0.0
        %1513 = vmatprep.subr.mxu0 0.0
        %1514 = vmatpush1.msra.mxu0 0.0
        %1515 = vmatprep.subr.mxu0 0.0
        %1516 = vmatpush1.msra.mxu0 0.0
        %1517 = vmatprep.subr.mxu0 0.0
        %1518 = vmatpush1.msra.mxu0 0.0
        %1519 = vmatprep.subr.mxu0 0.0
        %1520 = vmatpush1.msra.mxu0 0.0
        %1521 = vmatprep.subr.mxu0 0.0
        %1522 = vmatpush1.msra.mxu0 0.0
        %1523 = vmatprep.subr.mxu0 0.0
        %1524 = vmatpush1.msra.mxu0 0.0
        %1525 = vmatprep.subr.mxu0 0.0
        %1526 = vmatpush1.msra.mxu0 0.0
        %1527 = vmatprep.subr.mxu0 0.0
        %1528 = vmatpush1.msra.mxu0 0.0
        %1529 = vmatprep.subr.mxu0 0.0
        %1530 = vmatpush1.msra.mxu0 0.0
        %1531 = vmatprep.subr.mxu0 0.0
        %1532 = vmatpush1.msra.mxu0 0.0
        %1533 = vmatprep.subr.mxu0 0.0
        %1534 = vmatpush1.msra.mxu0 0.0
        %1535 = vmatprep.subr.mxu0 0.0
        %1536 = vmatpush1.msra.mxu0 0.0
        %1537 = vmatprep.mubr.f32.mxu0 0.0
        %1538 = vmatmul.mubr.f32.gmra.mrb[0].mxu0 %v1468
        %v1539 = vpop.f32.mrb[0].mxu0
        %v1540 = vadd.f32 0.0, %v1539
        %v1541 = vpop.f32.mrb[0].mxu0
        %1542 = vdwg.mxu0
        %v1543 = vadd.f32 %v1361, %v1540
        %v1544 = vld [vmem:[%s901] ss:$2 sm:$0xff]
        %v1545 = vld [vmem:[%s903] ss:$2 sm:$0xff]
        %s1546 = scalar_lea.vmem %s1, 28
        %v1547 = vld [vmem:[%s1546] sm:$0xf]
        %v1548 = vcombine.high %v1544, 0.0
        %v1550 = vunpack.c.l.s4 1983009808
        %v1551 = vunpack.c.0.s8 %v1550
        %v1552 = vlaneseq
        %v1553 = vshrl.u32 %v1552, 7
        %v1554 = vsub.s32 %v1551, %v1553
        %v1555 = vrot.slane %v1544, %v1554
        %v1557 = vunpack.c.l.s4 1983009808
        %v1558 = vunpack.c.0.s8 %v1557
        %v1559 = vlaneseq
        %v1560 = vshrl.u32 %v1559, 7
        %v1561 = vsub.s32 %v1558, %v1560
        %v1562 = vrot.slane %v1548, %v1561
        %v1563 = vcombine.high %v1545, 0.0
        %v1565 = vunpack.c.l.s4 1983009808
        %v1566 = vunpack.c.0.s8 %v1565
        %v1567 = vlaneseq
        %v1568 = vshrl.u32 %v1567, 7
        %v1569 = vsub.s32 %v1566, %v1568
        %v1570 = vrot.slane %v1545, %v1569
        %v1572 = vunpack.c.l.s4 1983009808
        %v1573 = vunpack.c.0.s8 %v1572
        %v1574 = vlaneseq
        %v1575 = vshrl.u32 %v1574, 7
        %v1576 = vsub.s32 %v1573, %v1575
        %v1577 = vrot.slane %v1563, %v1576
        %v1578 = vcombine.low %v1555, %v1570
        %v1579 = vcombine.high %v1555, %v1570
        %v1581 = vunpack.c.l.s4 1934713408
        %v1582 = vunpack.c.0.s8 %v1581
        %v1583 = vlaneseq
        %v1584 = vshrl.u32 %v1583, 7
        %v1585 = vsub.s32 %v1582, %v1584
        %v1586 = vrot.slane %v1578, %v1585
        %v1588 = vunpack.c.l.s4 1934713408
        %v1589 = vunpack.c.0.s8 %v1588
        %v1590 = vlaneseq
        %v1591 = vshrl.u32 %v1590, 7
        %v1592 = vsub.s32 %v1589, %v1591
        %v1593 = vrot.slane %v1579, %v1592
        %v1594 = vcombine.low %v1562, %v1577
        %v1595 = vcombine.high %v1562, %v1577
        %v1597 = vunpack.c.l.s4 1934713408
        %v1598 = vunpack.c.0.s8 %v1597
        %v1599 = vlaneseq
        %v1600 = vshrl.u32 %v1599, 7
        %v1601 = vsub.s32 %v1598, %v1600
        %v1602 = vrot.slane %v1594, %v1601
        %v1604 = vunpack.c.l.s4 1934713408
        %v1605 = vunpack.c.0.s8 %v1604
        %v1606 = vlaneseq
        %v1607 = vshrl.u32 %v1606, 7
        %v1608 = vsub.s32 %v1605, %v1607
        %v1609 = vrot.slane %v1595, %v1608
        %v1610 = vcombine.high %v1586, 0.0
        %v1611 = vcombine.high %v1593, 0.0
        %v1612 = vcombine.high %v1602, 0.0
        %v1613 = vcombine.high %v1609, 0.0
        %1615 = vrot.lane.b32.xlu0 %v1610, 8
        %v1616 = vpop.permute.xlu0 %1615
        %1619 = vrot.lane.b32.xlu0 %v1593, 16
        %v1620 = vpop.permute.xlu0 %1619
        %1623 = vrot.lane.b32.xlu0 %v1611, 24
        %v1624 = vpop.permute.xlu0 %1623
        %1627 = vrot.lane.b32.xlu0 %v1602, 32
        %v1628 = vpop.permute.xlu0 %1627
        %1631 = vrot.lane.b32.xlu0 %v1612, 40
        %v1632 = vpop.permute.xlu0 %1631
        %1635 = vrot.lane.b32.xlu0 %v1609, 48
        %v1636 = vpop.permute.xlu0 %1635
        %1639 = vrot.lane.b32.xlu0 %v1613, 56
        %v1640 = vpop.permute.xlu0 %1639
        %v1642 = vsel %vm418, %v1586, %v1616
        %v1643 = vsel %vm628, %v1642, %v1620
        %v1644 = vsel %vm630, %v1643, %v1624
        %v1645 = vsel %vm632, %v1644, %v1628
        %v1646 = vsel %vm634, %v1645, %v1632
        %v1647 = vsel %vm636, %v1646, %v1636
        %v1648 = vsel %vm638, %v1647, %v1640
        %v1650 = vsel %vm747, %v1547, 0
        %v1653 = vsel %vm751, %v1648, 0
        %1655 = vmatprep.subr.mxu0 0.0
        %1656 = vmatpush1.msra.mxu0 %v1653
        %1657 = vmatprep.subr.mxu0 0.0
        %1658 = vmatpush1.msra.mxu0 0.0
        %1659 = vmatprep.subr.mxu0 0.0
        %1660 = vmatpush1.msra.mxu0 0.0
        %1661 = vmatprep.subr.mxu0 0.0
        %1662 = vmatpush1.msra.mxu0 0.0
        %1663 = vmatprep.subr.mxu0 0.0
        %1664 = vmatpush1.msra.mxu0 0.0
        %1665 = vmatprep.subr.mxu0 0.0
        %1666 = vmatpush1.msra.mxu0 0.0
        %1667 = vmatprep.subr.mxu0 0.0
        %1668 = vmatpush1.msra.mxu0 0.0
        %1669 = vmatprep.subr.mxu0 0.0
        %1670 = vmatpush1.msra.mxu0 0.0
        %1671 = vmatprep.subr.mxu0 0.0
        %1672 = vmatpush1.msra.mxu0 0.0
        %1673 = vmatprep.subr.mxu0 0.0
        %1674 = vmatpush1.msra.mxu0 0.0
        %1675 = vmatprep.subr.mxu0 0.0
        %1676 = vmatpush1.msra.mxu0 0.0
        %1677 = vmatprep.subr.mxu0 0.0
        %1678 = vmatpush1.msra.mxu0 0.0
        %1679 = vmatprep.subr.mxu0 0.0
        %1680 = vmatpush1.msra.mxu0 0.0
        %1681 = vmatprep.subr.mxu0 0.0
        %1682 = vmatpush1.msra.mxu0 0.0
        %1683 = vmatprep.subr.mxu0 0.0
        %1684 = vmatpush1.msra.mxu0 0.0
        %1685 = vmatprep.subr.mxu0 0.0
        %1686 = vmatpush1.msra.mxu0 0.0
        %1687 = vmatprep.subr.mxu0 0.0
        %1688 = vmatpush1.msra.mxu0 0.0
        %1689 = vmatprep.subr.mxu0 0.0
        %1690 = vmatpush1.msra.mxu0 0.0
        %1691 = vmatprep.subr.mxu0 0.0
        %1692 = vmatpush1.msra.mxu0 0.0
        %1693 = vmatprep.subr.mxu0 0.0
        %1694 = vmatpush1.msra.mxu0 0.0
        %1695 = vmatprep.subr.mxu0 0.0
        %1696 = vmatpush1.msra.mxu0 0.0
        %1697 = vmatprep.subr.mxu0 0.0
        %1698 = vmatpush1.msra.mxu0 0.0
        %1699 = vmatprep.subr.mxu0 0.0
        %1700 = vmatpush1.msra.mxu0 0.0
        %1701 = vmatprep.subr.mxu0 0.0
        %1702 = vmatpush1.msra.mxu0 0.0
        %1703 = vmatprep.subr.mxu0 0.0
        %1704 = vmatpush1.msra.mxu0 0.0
        %1705 = vmatprep.subr.mxu0 0.0
        %1706 = vmatpush1.msra.mxu0 0.0
        %1707 = vmatprep.subr.mxu0 0.0
        %1708 = vmatpush1.msra.mxu0 0.0
        %1709 = vmatprep.subr.mxu0 0.0
        %1710 = vmatpush1.msra.mxu0 0.0
        %1711 = vmatprep.subr.mxu0 0.0
        %1712 = vmatpush1.msra.mxu0 0.0
        %1713 = vmatprep.subr.mxu0 0.0
        %1714 = vmatpush1.msra.mxu0 0.0
        %1715 = vmatprep.subr.mxu0 0.0
        %1716 = vmatpush1.msra.mxu0 0.0
        %1717 = vmatprep.subr.mxu0 0.0
        %1718 = vmatpush1.msra.mxu0 0.0
        %1719 = vmatprep.mubr.f32.mxu0 0.0
        %1720 = vmatmul.mubr.f32.gmra.mrb[0].mxu0 %v1650
        %v1721 = vpop.f32.mrb[0].mxu0
        %v1722 = vadd.f32 0.0, %v1721
        %v1723 = vpop.f32.mrb[0].mxu0
        %1724 = vdwg.mxu0
        %v1725 = vadd.f32 %v1543, %v1722
        %s1726 = scalar_lea.vmem %s5, 32
        %v1727 = vld [vmem:[%s1726] sm:$0xff]
        %v1728 = vld [vmem:[%s1726 + $0x8] sm:$0x7f]
        %v1730 = vsel %vm313, %v1728, 0
        %1732 = vmatprep.subr.mxu0 0.0
        %1733 = vmatpush1.msra.mxu0 %v1727
        %1734 = vmatprep.subr.mxu0 0.0
        %1735 = vmatpush1.msra.mxu0 %v1730
        %1736 = vmatprep.subr.mxu0 0.0
        %1737 = vmatpush1.msra.mxu0 0.0
        %1738 = vmatprep.subr.mxu0 0.0
        %1739 = vmatpush1.msra.mxu0 0.0
        %1740 = vmatprep.subr.mxu0 0.0
        %1741 = vmatpush1.msra.mxu0 0.0
        %1742 = vmatprep.subr.mxu0 0.0
        %1743 = vmatpush1.msra.mxu0 0.0
        %1744 = vmatprep.subr.mxu0 0.0
        %1745 = vmatpush1.msra.mxu0 0.0
        %1746 = vmatprep.subr.mxu0 0.0
        %1747 = vmatpush1.msra.mxu0 0.0
        %1748 = vmatprep.subr.mxu0 0.0
        %1749 = vmatpush1.msra.mxu0 0.0
        %1750 = vmatprep.subr.mxu0 0.0
        %1751 = vmatpush1.msra.mxu0 0.0
        %1752 = vmatprep.subr.mxu0 0.0
        %1753 = vmatpush1.msra.mxu0 0.0
        %1754 = vmatprep.subr.mxu0 0.0
        %1755 = vmatpush1.msra.mxu0 0.0
        %1756 = vmatprep.subr.mxu0 0.0
        %1757 = vmatpush1.msra.mxu0 0.0
        %1758 = vmatprep.subr.mxu0 0.0
        %1759 = vmatpush1.msra.mxu0 0.0
        %1760 = vmatprep.subr.mxu0 0.0
        %1761 = vmatpush1.msra.mxu0 0.0
        %1762 = vmatprep.subr.mxu0 0.0
        %1763 = vmatpush1.msra.mxu0 0.0
        %1764 = vmatprep.subr.mxu0 0.0
        %1765 = vmatpush1.msra.mxu0 0.0
        %1766 = vmatprep.subr.mxu0 0.0
        %1767 = vmatpush1.msra.mxu0 0.0
        %1768 = vmatprep.subr.mxu0 0.0
        %1769 = vmatpush1.msra.mxu0 0.0
        %1770 = vmatprep.subr.mxu0 0.0
        %1771 = vmatpush1.msra.mxu0 0.0
        %1772 = vmatprep.subr.mxu0 0.0
        %1773 = vmatpush1.msra.mxu0 0.0
        %1774 = vmatprep.subr.mxu0 0.0
        %1775 = vmatpush1.msra.mxu0 0.0
        %1776 = vmatprep.subr.mxu0 0.0
        %1777 = vmatpush1.msra.mxu0 0.0
        %1778 = vmatprep.subr.mxu0 0.0
        %1779 = vmatpush1.msra.mxu0 0.0
        %1780 = vmatprep.subr.mxu0 0.0
        %1781 = vmatpush1.msra.mxu0 0.0
        %1782 = vmatprep.subr.mxu0 0.0
        %1783 = vmatpush1.msra.mxu0 0.0
        %1784 = vmatprep.subr.mxu0 0.0
        %1785 = vmatpush1.msra.mxu0 0.0
        %1786 = vmatprep.subr.mxu0 0.0
        %1787 = vmatpush1.msra.mxu0 0.0
        %1788 = vmatprep.subr.mxu0 0.0
        %1789 = vmatpush1.msra.mxu0 0.0
        %1790 = vmatprep.subr.mxu0 0.0
        %1791 = vmatpush1.msra.mxu0 0.0
        %1792 = vmatprep.subr.mxu0 0.0
        %1793 = vmatpush1.msra.mxu0 0.0
        %1794 = vmatprep.subr.mxu0 0.0
        %1795 = vmatpush1.msra.mxu0 0.0
        %1796 = vmatprep.mubr.f32.mxu0 0.0
        %1797 = vmatmul.mubr.f32.gmra.mrb[0].mxu0 %v425
        %v1798 = vpop.f32.mrb[0].mxu0
        %v1799 = vadd.f32 0.0, %v1798
        %v1800 = vpop.f32.mrb[0].mxu0
        %1801 = vmatprep.mubr.f32.mxu0 0.0
        %1802 = vmatmul.mubr.f32.gmra.mrb[0].mxu0 %v428
        %v1803 = vpop.f32.mrb[0].mxu0
        %v1804 = vadd.f32 0.0, %v1803
        %v1805 = vpop.f32.mrb[0].mxu0
        %1806 = vmatprep.mubr.f32.mxu0 0.0
        %1807 = vmatmul.mubr.f32.gmra.mrb[0].mxu0 %v431
        %v1808 = vpop.f32.mrb[0].mxu0
        %v1809 = vadd.f32 0.0, %v1808
        %v1810 = vpop.f32.mrb[0].mxu0
        %1811 = vmatprep.mubr.f32.mxu0 0.0
        %1812 = vmatmul.mubr.f32.gmra.mrb[0].mxu0 %v434
        %v1813 = vpop.f32.mrb[0].mxu0
        %v1814 = vadd.f32 0.0, %v1813
        %v1815 = vpop.f32.mrb[0].mxu0
        %1816 = vdwg.mxu0
        %1817 = vst.msk [vmem:[#allocation2 + $0x8] sm:$0xff] %vm418, %v1799
        %1818 = vst.msk [vmem:[#allocation2 + $0x10] sm:$0xff] %vm418, %v1804
        %1819 = vst.msk [vmem:[#allocation2 + $0x20] sm:$0xff] %vm418, %v1809
        %1820 = vst.msk [vmem:[#allocation2 + $0x28] sm:$0xff] %vm418, %v1814
        %v1821 = vld [vmem:[%s528] ss:$2 sm:$0xff]
        %v1822 = vld [vmem:[%s530] ss:$2 sm:$0xff]
        %s1823 = scalar_lea.vmem %s1, 8
        %v1824 = vld [vmem:[%s1823] sm:$0xf]
        %v1825 = vcombine.high %v1821, 0.0
        %v1827 = vunpack.c.l.s4 1983009808
        %v1828 = vunpack.c.0.s8 %v1827
        %v1829 = vlaneseq
        %v1830 = vshrl.u32 %v1829, 7
        %v1831 = vsub.s32 %v1828, %v1830
        %v1832 = vrot.slane %v1821, %v1831
        %v1834 = vunpack.c.l.s4 1983009808
        %v1835 = vunpack.c.0.s8 %v1834
        %v1836 = vlaneseq
        %v1837 = vshrl.u32 %v1836, 7
        %v1838 = vsub.s32 %v1835, %v1837
        %v1839 = vrot.slane %v1825, %v1838
        %v1840 = vcombine.high %v1822, 0.0
        %v1842 = vunpack.c.l.s4 1983009808
        %v1843 = vunpack.c.0.s8 %v1842
        %v1844 = vlaneseq
        %v1845 = vshrl.u32 %v1844, 7
        %v1846 = vsub.s32 %v1843, %v1845
        %v1847 = vrot.slane %v1822, %v1846
        %v1849 = vunpack.c.l.s4 1983009808
        %v1850 = vunpack.c.0.s8 %v1849
        %v1851 = vlaneseq
        %v1852 = vshrl.u32 %v1851, 7
        %v1853 = vsub.s32 %v1850, %v1852
        %v1854 = vrot.slane %v1840, %v1853
        %v1855 = vcombine.low %v1832, %v1847
        %v1856 = vcombine.high %v1832, %v1847
        %v1858 = vunpack.c.l.s4 1934713408
        %v1859 = vunpack.c.0.s8 %v1858
        %v1860 = vlaneseq
        %v1861 = vshrl.u32 %v1860, 7
        %v1862 = vsub.s32 %v1859, %v1861
        %v1863 = vrot.slane %v1855, %v1862
        %v1865 = vunpack.c.l.s4 1934713408
        %v1866 = vunpack.c.0.s8 %v1865
        %v1867 = vlaneseq
        %v1868 = vshrl.u32 %v1867, 7
        %v1869 = vsub.s32 %v1866, %v1868
        %v1870 = vrot.slane %v1856, %v1869
        %v1871 = vcombine.low %v1839, %v1854
        %v1872 = vcombine.high %v1839, %v1854
        %v1874 = vunpack.c.l.s4 1934713408
        %v1875 = vunpack.c.0.s8 %v1874
        %v1876 = vlaneseq
        %v1877 = vshrl.u32 %v1876, 7
        %v1878 = vsub.s32 %v1875, %v1877
        %v1879 = vrot.slane %v1871, %v1878
        %v1881 = vunpack.c.l.s4 1934713408
        %v1882 = vunpack.c.0.s8 %v1881
        %v1883 = vlaneseq
        %v1884 = vshrl.u32 %v1883, 7
        %v1885 = vsub.s32 %v1882, %v1884
        %v1886 = vrot.slane %v1872, %v1885
        %v1887 = vcombine.high %v1863, 0.0
        %v1888 = vcombine.high %v1870, 0.0
        %v1889 = vcombine.high %v1879, 0.0
        %v1890 = vcombine.high %v1886, 0.0
        %1892 = vrot.lane.b32.xlu0 %v1887, 8
        %v1893 = vpop.permute.xlu0 %1892
        %1896 = vrot.lane.b32.xlu0 %v1870, 16
        %v1897 = vpop.permute.xlu0 %1896
        %1900 = vrot.lane.b32.xlu0 %v1888, 24
        %v1901 = vpop.permute.xlu0 %1900
        %1904 = vrot.lane.b32.xlu0 %v1879, 32
        %v1905 = vpop.permute.xlu0 %1904
        %1908 = vrot.lane.b32.xlu0 %v1889, 40
        %v1909 = vpop.permute.xlu0 %1908
        %1912 = vrot.lane.b32.xlu0 %v1886, 48
        %v1913 = vpop.permute.xlu0 %1912
        %1916 = vrot.lane.b32.xlu0 %v1890, 56
        %v1917 = vpop.permute.xlu0 %1916
        %v1919 = vsel %vm418, %v1863, %v1893
        %v1920 = vsel %vm628, %v1919, %v1897
        %v1921 = vsel %vm630, %v1920, %v1901
        %v1922 = vsel %vm632, %v1921, %v1905
        %v1923 = vsel %vm634, %v1922, %v1909
        %v1924 = vsel %vm636, %v1923, %v1913
        %v1925 = vsel %vm638, %v1924, %v1917
        %v1927 = vsel %vm747, %v1824, 0
        %v1930 = vsel %vm751, %v1925, 0
        %1932 = vmatprep.subr.mxu0 0.0
        %1933 = vmatpush1.msra.mxu0 %v1930
        %1934 = vmatprep.subr.mxu0 0.0
        %1935 = vmatpush1.msra.mxu0 0.0
        %1936 = vmatprep.subr.mxu0 0.0
        %1937 = vmatpush1.msra.mxu0 0.0
        %1938 = vmatprep.subr.mxu0 0.0
        %1939 = vmatpush1.msra.mxu0 0.0
        %1940 = vmatprep.subr.mxu0 0.0
        %1941 = vmatpush1.msra.mxu0 0.0
        %1942 = vmatprep.subr.mxu0 0.0
        %1943 = vmatpush1.msra.mxu0 0.0
        %1944 = vmatprep.subr.mxu0 0.0
        %1945 = vmatpush1.msra.mxu0 0.0
        %1946 = vmatprep.subr.mxu0 0.0
        %1947 = vmatpush1.msra.mxu0 0.0
        %1948 = vmatprep.subr.mxu0 0.0
        %1949 = vmatpush1.msra.mxu0 0.0
        %1950 = vmatprep.subr.mxu0 0.0
        %1951 = vmatpush1.msra.mxu0 0.0
        %1952 = vmatprep.subr.mxu0 0.0
        %1953 = vmatpush1.msra.mxu0 0.0
        %1954 = vmatprep.subr.mxu0 0.0
        %1955 = vmatpush1.msra.mxu0 0.0
        %1956 = vmatprep.subr.mxu0 0.0
        %1957 = vmatpush1.msra.mxu0 0.0
        %1958 = vmatprep.subr.mxu0 0.0
        %1959 = vmatpush1.msra.mxu0 0.0
        %1960 = vmatprep.subr.mxu0 0.0
        %1961 = vmatpush1.msra.mxu0 0.0
        %1962 = vmatprep.subr.mxu0 0.0
        %1963 = vmatpush1.msra.mxu0 0.0
        %1964 = vmatprep.subr.mxu0 0.0
        %1965 = vmatpush1.msra.mxu0 0.0
        %1966 = vmatprep.subr.mxu0 0.0
        %1967 = vmatpush1.msra.mxu0 0.0
        %1968 = vmatprep.subr.mxu0 0.0
        %1969 = vmatpush1.msra.mxu0 0.0
        %1970 = vmatprep.subr.mxu0 0.0
        %1971 = vmatpush1.msra.mxu0 0.0
        %1972 = vmatprep.subr.mxu0 0.0
        %1973 = vmatpush1.msra.mxu0 0.0
        %1974 = vmatprep.subr.mxu0 0.0
        %1975 = vmatpush1.msra.mxu0 0.0
        %1976 = vmatprep.subr.mxu0 0.0
        %1977 = vmatpush1.msra.mxu0 0.0
        %1978 = vmatprep.subr.mxu0 0.0
        %1979 = vmatpush1.msra.mxu0 0.0
        %1980 = vmatprep.subr.mxu0 0.0
        %1981 = vmatpush1.msra.mxu0 0.0
        %1982 = vmatprep.subr.mxu0 0.0
        %1983 = vmatpush1.msra.mxu0 0.0
        %1984 = vmatprep.subr.mxu0 0.0
        %1985 = vmatpush1.msra.mxu0 0.0
        %1986 = vmatprep.subr.mxu0 0.0
        %1987 = vmatpush1.msra.mxu0 0.0
        %1988 = vmatprep.subr.mxu0 0.0
        %1989 = vmatpush1.msra.mxu0 0.0
        %1990 = vmatprep.subr.mxu0 0.0
        %1991 = vmatpush1.msra.mxu0 0.0
        %1992 = vmatprep.subr.mxu0 0.0
        %1993 = vmatpush1.msra.mxu0 0.0
        %1994 = vmatprep.subr.mxu0 0.0
        %1995 = vmatpush1.msra.mxu0 0.0
        %1996 = vmatprep.mubr.f32.mxu0 0.0
        %1997 = vmatmul.mubr.f32.gmra.mrb[0].mxu0 %v1927
        %v1998 = vpop.f32.mrb[0].mxu0
        %v1999 = vadd.f32 0.0, %v1998
        %v2000 = vpop.f32.mrb[0].mxu0
        %2001 = vdwg.mxu0
        %v2002 = vadd.f32 %v1725, %v1999
        %v2003 = vld [vmem:[%s640] ss:$2 sm:$0xff]
        %v2004 = vld [vmem:[%s642] ss:$2 sm:$0xff]
        %s2005 = scalar_lea.vmem %s1, 20
        %v2006 = vld [vmem:[%s2005] sm:$0xf]
        %v2007 = vcombine.high %v2003, 0.0
        %v2009 = vunpack.c.l.s4 1983009808
        %v2010 = vunpack.c.0.s8 %v2009
        %v2011 = vlaneseq
        %v2012 = vshrl.u32 %v2011, 7
        %v2013 = vsub.s32 %v2010, %v2012
        %v2014 = vrot.slane %v2003, %v2013
        %v2016 = vunpack.c.l.s4 1983009808
        %v2017 = vunpack.c.0.s8 %v2016
        %v2018 = vlaneseq
        %v2019 = vshrl.u32 %v2018, 7
        %v2020 = vsub.s32 %v2017, %v2019
        %v2021 = vrot.slane %v2007, %v2020
        %v2022 = vcombine.high %v2004, 0.0
        %v2024 = vunpack.c.l.s4 1983009808
        %v2025 = vunpack.c.0.s8 %v2024
        %v2026 = vlaneseq
        %v2027 = vshrl.u32 %v2026, 7
        %v2028 = vsub.s32 %v2025, %v2027
        %v2029 = vrot.slane %v2004, %v2028
        %v2031 = vunpack.c.l.s4 1983009808
        %v2032 = vunpack.c.0.s8 %v2031
        %v2033 = vlaneseq
        %v2034 = vshrl.u32 %v2033, 7
        %v2035 = vsub.s32 %v2032, %v2034
        %v2036 = vrot.slane %v2022, %v2035
        %v2037 = vcombine.low %v2014, %v2029
        %v2038 = vcombine.high %v2014, %v2029
        %v2040 = vunpack.c.l.s4 1934713408
        %v2041 = vunpack.c.0.s8 %v2040
        %v2042 = vlaneseq
        %v2043 = vshrl.u32 %v2042, 7
        %v2044 = vsub.s32 %v2041, %v2043
        %v2045 = vrot.slane %v2037, %v2044
        %v2047 = vunpack.c.l.s4 1934713408
        %v2048 = vunpack.c.0.s8 %v2047
        %v2049 = vlaneseq
        %v2050 = vshrl.u32 %v2049, 7
        %v2051 = vsub.s32 %v2048, %v2050
        %v2052 = vrot.slane %v2038, %v2051
        %v2053 = vcombine.low %v2021, %v2036
        %v2054 = vcombine.high %v2021, %v2036
        %v2056 = vunpack.c.l.s4 1934713408
        %v2057 = vunpack.c.0.s8 %v2056
        %v2058 = vlaneseq
        %v2059 = vshrl.u32 %v2058, 7
        %v2060 = vsub.s32 %v2057, %v2059
        %v2061 = vrot.slane %v2053, %v2060
        %v2063 = vunpack.c.l.s4 1934713408
        %v2064 = vunpack.c.0.s8 %v2063
        %v2065 = vlaneseq
        %v2066 = vshrl.u32 %v2065, 7
        %v2067 = vsub.s32 %v2064, %v2066
        %v2068 = vrot.slane %v2054, %v2067
        %v2069 = vcombine.high %v2045, 0.0
        %v2070 = vcombine.high %v2052, 0.0
        %v2071 = vcombine.high %v2061, 0.0
        %v2072 = vcombine.high %v2068, 0.0
        %2074 = vrot.lane.b32.xlu0 %v2069, 8
        %v2075 = vpop.permute.xlu0 %2074
        %2078 = vrot.lane.b32.xlu0 %v2052, 16
        %v2079 = vpop.permute.xlu0 %2078
        %2082 = vrot.lane.b32.xlu0 %v2070, 24
        %v2083 = vpop.permute.xlu0 %2082
        %2086 = vrot.lane.b32.xlu0 %v2061, 32
        %v2087 = vpop.permute.xlu0 %2086
        %2090 = vrot.lane.b32.xlu0 %v2071, 40
        %v2091 = vpop.permute.xlu0 %2090
        %2094 = vrot.lane.b32.xlu0 %v2068, 48
        %v2095 = vpop.permute.xlu0 %2094
        %2098 = vrot.lane.b32.xlu0 %v2072, 56
        %v2099 = vpop.permute.xlu0 %2098
        %v2101 = vsel %vm418, %v2045, %v2075
        %v2102 = vsel %vm628, %v2101, %v2079
        %v2103 = vsel %vm630, %v2102, %v2083
        %v2104 = vsel %vm632, %v2103, %v2087
        %v2105 = vsel %vm634, %v2104, %v2091
        %v2106 = vsel %vm636, %v2105, %v2095
        %v2107 = vsel %vm638, %v2106, %v2099
        %v2109 = vsel %vm747, %v2006, 0
        %v2112 = vsel %vm751, %v2107, 0
        %2114 = vmatprep.subr.mxu0 0.0
        %2115 = vmatpush1.msra.mxu0 %v2112
        %2116 = vmatprep.subr.mxu0 0.0
        %2117 = vmatpush1.msra.mxu0 0.0
        %2118 = vmatprep.subr.mxu0 0.0
        %2119 = vmatpush1.msra.mxu0 0.0
        %2120 = vmatprep.subr.mxu0 0.0
        %2121 = vmatpush1.msra.mxu0 0.0
        %2122 = vmatprep.subr.mxu0 0.0
        %2123 = vmatpush1.msra.mxu0 0.0
        %2124 = vmatprep.subr.mxu0 0.0
        %2125 = vmatpush1.msra.mxu0 0.0
        %2126 = vmatprep.subr.mxu0 0.0
        %2127 = vmatpush1.msra.mxu0 0.0
        %2128 = vmatprep.subr.mxu0 0.0
        %2129 = vmatpush1.msra.mxu0 0.0
        %2130 = vmatprep.subr.mxu0 0.0
        %2131 = vmatpush1.msra.mxu0 0.0
        %2132 = vmatprep.subr.mxu0 0.0
        %2133 = vmatpush1.msra.mxu0 0.0
        %2134 = vmatprep.subr.mxu0 0.0
        %2135 = vmatpush1.msra.mxu0 0.0
        %2136 = vmatprep.subr.mxu0 0.0
        %2137 = vmatpush1.msra.mxu0 0.0
        %2138 = vmatprep.subr.mxu0 0.0
        %2139 = vmatpush1.msra.mxu0 0.0
        %2140 = vmatprep.subr.mxu0 0.0
        %2141 = vmatpush1.msra.mxu0 0.0
        %2142 = vmatprep.subr.mxu0 0.0
        %2143 = vmatpush1.msra.mxu0 0.0
        %2144 = vmatprep.subr.mxu0 0.0
        %2145 = vmatpush1.msra.mxu0 0.0
        %2146 = vmatprep.subr.mxu0 0.0
        %2147 = vmatpush1.msra.mxu0 0.0
        %2148 = vmatprep.subr.mxu0 0.0
        %2149 = vmatpush1.msra.mxu0 0.0
        %2150 = vmatprep.subr.mxu0 0.0
        %2151 = vmatpush1.msra.mxu0 0.0
        %2152 = vmatprep.subr.mxu0 0.0
        %2153 = vmatpush1.msra.mxu0 0.0
        %2154 = vmatprep.subr.mxu0 0.0
        %2155 = vmatpush1.msra.mxu0 0.0
        %2156 = vmatprep.subr.mxu0 0.0
        %2157 = vmatpush1.msra.mxu0 0.0
        %2158 = vmatprep.subr.mxu0 0.0
        %2159 = vmatpush1.msra.mxu0 0.0
        %2160 = vmatprep.subr.mxu0 0.0
        %2161 = vmatpush1.msra.mxu0 0.0
        %2162 = vmatprep.subr.mxu0 0.0
        %2163 = vmatpush1.msra.mxu0 0.0
        %2164 = vmatprep.subr.mxu0 0.0
        %2165 = vmatpush1.msra.mxu0 0.0
        %2166 = vmatprep.subr.mxu0 0.0
        %2167 = vmatpush1.msra.mxu0 0.0
        %2168 = vmatprep.subr.mxu0 0.0
        %2169 = vmatpush1.msra.mxu0 0.0
        %2170 = vmatprep.subr.mxu0 0.0
        %2171 = vmatpush1.msra.mxu0 0.0
        %2172 = vmatprep.subr.mxu0 0.0
        %2173 = vmatpush1.msra.mxu0 0.0
        %2174 = vmatprep.subr.mxu0 0.0
        %2175 = vmatpush1.msra.mxu0 0.0
        %2176 = vmatprep.subr.mxu0 0.0
        %2177 = vmatpush1.msra.mxu0 0.0
        %2178 = vmatprep.mubr.f32.mxu0 0.0
        %2179 = vmatmul.mubr.f32.gmra.mrb[0].mxu0 %v2109
        %v2180 = vpop.f32.mrb[0].mxu0
        %v2181 = vadd.f32 0.0, %v2180
        %v2182 = vpop.f32.mrb[0].mxu0
        %2183 = vdwg.mxu0
        %v2184 = vadd.f32 %v2002, %v2181
        %v2185 = vld [vmem:[%s901] ss:$2 sm:$0xff]
        %v2186 = vld [vmem:[%s903] ss:$2 sm:$0xff]
        %s2187 = scalar_lea.vmem %s1, 32
        %v2188 = vld [vmem:[%s2187] sm:$0xf]
        %v2189 = vcombine.high %v2185, 0.0
        %v2191 = vunpack.c.l.s4 1983009808
        %v2192 = vunpack.c.0.s8 %v2191
        %v2193 = vlaneseq
        %v2194 = vshrl.u32 %v2193, 7
        %v2195 = vsub.s32 %v2192, %v2194
        %v2196 = vrot.slane %v2185, %v2195
        %v2198 = vunpack.c.l.s4 1983009808
        %v2199 = vunpack.c.0.s8 %v2198
        %v2200 = vlaneseq
        %v2201 = vshrl.u32 %v2200, 7
        %v2202 = vsub.s32 %v2199, %v2201
        %v2203 = vrot.slane %v2189, %v2202
        %v2204 = vcombine.high %v2186, 0.0
        %v2206 = vunpack.c.l.s4 1983009808
        %v2207 = vunpack.c.0.s8 %v2206
        %v2208 = vlaneseq
        %v2209 = vshrl.u32 %v2208, 7
        %v2210 = vsub.s32 %v2207, %v2209
        %v2211 = vrot.slane %v2186, %v2210
        %v2213 = vunpack.c.l.s4 1983009808
        %v2214 = vunpack.c.0.s8 %v2213
        %v2215 = vlaneseq
        %v2216 = vshrl.u32 %v2215, 7
        %v2217 = vsub.s32 %v2214, %v2216
        %v2218 = vrot.slane %v2204, %v2217
        %v2219 = vcombine.low %v2196, %v2211
        %v2220 = vcombine.high %v2196, %v2211
        %v2222 = vunpack.c.l.s4 1934713408
        %v2223 = vunpack.c.0.s8 %v2222
        %v2224 = vlaneseq
        %v2225 = vshrl.u32 %v2224, 7
        %v2226 = vsub.s32 %v2223, %v2225
        %v2227 = vrot.slane %v2219, %v2226
        %v2229 = vunpack.c.l.s4 1934713408
        %v2230 = vunpack.c.0.s8 %v2229
        %v2231 = vlaneseq
        %v2232 = vshrl.u32 %v2231, 7
        %v2233 = vsub.s32 %v2230, %v2232
        %v2234 = vrot.slane %v2220, %v2233
        %v2235 = vcombine.low %v2203, %v2218
        %v2236 = vcombine.high %v2203, %v2218
        %v2238 = vunpack.c.l.s4 1934713408
        %v2239 = vunpack.c.0.s8 %v2238
        %v2240 = vlaneseq
        %v2241 = vshrl.u32 %v2240, 7
        %v2242 = vsub.s32 %v2239, %v2241
        %v2243 = vrot.slane %v2235, %v2242
        %v2245 = vunpack.c.l.s4 1934713408
        %v2246 = vunpack.c.0.s8 %v2245
        %v2247 = vlaneseq
        %v2248 = vshrl.u32 %v2247, 7
        %v2249 = vsub.s32 %v2246, %v2248
        %v2250 = vrot.slane %v2236, %v2249
        %v2251 = vcombine.high %v2227, 0.0
        %v2252 = vcombine.high %v2234, 0.0
        %v2253 = vcombine.high %v2243, 0.0
        %v2254 = vcombine.high %v2250, 0.0
        %2256 = vrot.lane.b32.xlu0 %v2251, 8
        %v2257 = vpop.permute.xlu0 %2256
        %2260 = vrot.lane.b32.xlu0 %v2234, 16
        %v2261 = vpop.permute.xlu0 %2260
        %2264 = vrot.lane.b32.xlu0 %v2252, 24
        %v2265 = vpop.permute.xlu0 %2264
        %2268 = vrot.lane.b32.xlu0 %v2243, 32
        %v2269 = vpop.permute.xlu0 %2268
        %2272 = vrot.lane.b32.xlu0 %v2253, 40
        %v2273 = vpop.permute.xlu0 %2272
        %2276 = vrot.lane.b32.xlu0 %v2250, 48
        %v2277 = vpop.permute.xlu0 %2276
        %2280 = vrot.lane.b32.xlu0 %v2254, 56
        %v2281 = vpop.permute.xlu0 %2280
        %v2283 = vsel %vm418, %v2227, %v2257
        %v2284 = vsel %vm628, %v2283, %v2261
        %v2285 = vsel %vm630, %v2284, %v2265
        %v2286 = vsel %vm632, %v2285, %v2269
        %v2287 = vsel %vm634, %v2286, %v2273
        %v2288 = vsel %vm636, %v2287, %v2277
        %v2289 = vsel %vm638, %v2288, %v2281
        %v2291 = vsel %vm747, %v2188, 0
        %v2294 = vsel %vm751, %v2289, 0
        %2296 = vmatprep.subr.mxu0 0.0
        %2297 = vmatpush1.msra.mxu0 %v2294
        %2298 = vmatprep.subr.mxu0 0.0
        %2299 = vmatpush1.msra.mxu0 0.0
        %2300 = vmatprep.subr.mxu0 0.0
        %2301 = vmatpush1.msra.mxu0 0.0
        %2302 = vmatprep.subr.mxu0 0.0
        %2303 = vmatpush1.msra.mxu0 0.0
        %2304 = vmatprep.subr.mxu0 0.0
        %2305 = vmatpush1.msra.mxu0 0.0
        %2306 = vmatprep.subr.mxu0 0.0
        %2307 = vmatpush1.msra.mxu0 0.0
        %2308 = vmatprep.subr.mxu0 0.0
        %2309 = vmatpush1.msra.mxu0 0.0
        %2310 = vmatprep.subr.mxu0 0.0
        %2311 = vmatpush1.msra.mxu0 0.0
        %2312 = vmatprep.subr.mxu0 0.0
        %2313 = vmatpush1.msra.mxu0 0.0
        %2314 = vmatprep.subr.mxu0 0.0
        %2315 = vmatpush1.msra.mxu0 0.0
        %2316 = vmatprep.subr.mxu0 0.0
        %2317 = vmatpush1.msra.mxu0 0.0
        %2318 = vmatprep.subr.mxu0 0.0
        %2319 = vmatpush1.msra.mxu0 0.0
        %2320 = vmatprep.subr.mxu0 0.0
        %2321 = vmatpush1.msra.mxu0 0.0
        %2322 = vmatprep.subr.mxu0 0.0
        %2323 = vmatpush1.msra.mxu0 0.0
        %2324 = vmatprep.subr.mxu0 0.0
        %2325 = vmatpush1.msra.mxu0 0.0
        %2326 = vmatprep.subr.mxu0 0.0
        %2327 = vmatpush1.msra.mxu0 0.0
        %2328 = vmatprep.subr.mxu0 0.0
        %2329 = vmatpush1.msra.mxu0 0.0
        %2330 = vmatprep.subr.mxu0 0.0
        %2331 = vmatpush1.msra.mxu0 0.0
        %2332 = vmatprep.subr.mxu0 0.0
        %2333 = vmatpush1.msra.mxu0 0.0
        %2334 = vmatprep.subr.mxu0 0.0
        %2335 = vmatpush1.msra.mxu0 0.0
        %2336 = vmatprep.subr.mxu0 0.0
        %2337 = vmatpush1.msra.mxu0 0.0
        %2338 = vmatprep.subr.mxu0 0.0
        %2339 = vmatpush1.msra.mxu0 0.0
        %2340 = vmatprep.subr.mxu0 0.0
        %2341 = vmatpush1.msra.mxu0 0.0
        %2342 = vmatprep.subr.mxu0 0.0
        %2343 = vmatpush1.msra.mxu0 0.0
        %2344 = vmatprep.subr.mxu0 0.0
        %2345 = vmatpush1.msra.mxu0 0.0
        %2346 = vmatprep.subr.mxu0 0.0
        %2347 = vmatpush1.msra.mxu0 0.0
        %2348 = vmatprep.subr.mxu0 0.0
        %2349 = vmatpush1.msra.mxu0 0.0
        %2350 = vmatprep.subr.mxu0 0.0
        %2351 = vmatpush1.msra.mxu0 0.0
        %2352 = vmatprep.subr.mxu0 0.0
        %2353 = vmatpush1.msra.mxu0 0.0
        %2354 = vmatprep.subr.mxu0 0.0
        %2355 = vmatpush1.msra.mxu0 0.0
        %2356 = vmatprep.subr.mxu0 0.0
        %2357 = vmatpush1.msra.mxu0 0.0
        %2358 = vmatprep.subr.mxu0 0.0
        %2359 = vmatpush1.msra.mxu0 0.0
        %2360 = vmatprep.mubr.f32.mxu0 0.0
        %2361 = vmatmul.mubr.f32.gmra.mrb[0].mxu0 %v2291
        %v2362 = vpop.f32.mrb[0].mxu0
        %v2363 = vadd.f32 0.0, %v2362
        %v2364 = vpop.f32.mrb[0].mxu0
        %2365 = vdwg.mxu0
        %v2366 = vadd.f32 %v2184, %v2363
        %v2367 = vld [vmem:[%s2] sm:$0xf]
        %2369 = vset.pattern.permute.xlu0 0
        %2370 = vperm.xlu0 %2369, %v2367
        %v2371 = vpop.permute.xlu0 %2370
        %v2373 = vadd.f32 %v2366, %v2371
        %v2374 = vsub.f32 0.0, %v2373
        %v2375 = vmul.f32 %v2374, 1.442695
        %v2376 = vpow.pop %v2375
        %v2377 = vadd.f32 %v2376, 1.0
        %v2378 = vrcp.pop %v2377
        %v2379 = vmul.f32 %v2373, %v2378
        %vm2380 = vcmask 519168
        %2381 = vst.msk [vmem:[%s296] sm:$0xf] %vm2380, %v2379
        %2386 = vrot.lane.b32.xlu0 %v410, 127
        %v2387 = vpop.permute.xlu0 %2386
        %2388 = vrot.lane.b32.xlu0 %v416, 127
        %v2389 = vpop.permute.xlu0 %2388
        %2390 = vrot.lane.b32.xlu0 %v412, 127
        %v2391 = vpop.permute.xlu0 %2390
        %2392 = vrot.lane.b32.xlu0 %v417, 127
        %v2393 = vpop.permute.xlu0 %2392
        %vm2398 = vcmask 113664
        %v2399 = vsel %vm2398, %v2387, -1e+30
        %v2400 = vsel %vm2398, %v2389, -1e+30
        %v2401 = vsel %vm2398, %v2391, -1e+30
        %v2402 = vsel %vm2398, %v2393, -1e+30
        %2403 = vrot.lane.b32.xlu0 %v410, 1
        %v2404 = vpop.permute.xlu0 %2403
        %2405 = vrot.lane.b32.xlu0 %v416, 1
        %v2406 = vpop.permute.xlu0 %2405
        %2407 = vrot.lane.b32.xlu0 %v412, 1
        %v2408 = vpop.permute.xlu0 %2407
        %2409 = vrot.lane.b32.xlu0 %v417, 1
        %v2410 = vpop.permute.xlu0 %2409
        %vm2415 = vcmask 7168
        %v2416 = vsel %vm2415, -1e+30, %v2404
        %v2417 = vsel %vm2415, -1e+30, %v2406
        %v2418 = vsel %vm2415, -1e+30, %v2408
        %v2419 = vsel %vm2415, -1e+30, %v2410
        %v2420 = vmax.f32 %v2399, %v2416
        %v2421 = vmax.f32 %v2400, %v2417
        %v2422 = vmax.f32 %v2401, %v2418
        %v2423 = vmax.f32 %v2402, %v2419
        %v2424 = vmax.f32 %v410, %v2420
        %v2425 = vmax.f32 %v416, %v2421
        %v2426 = vmax.f32 %v412, %v2422
        %v2427 = vmax.f32 %v417, %v2423
        %v2432 = vrot.slane %v2424, 1
        %v2433 = vrot.slane %v2425, 1
        %v2434 = vsel %vm313, %v2432, %v2433
        %v2435 = vrot.slane %v2426, 1
        %v2436 = vrot.slane %v2427, 1
        %v2437 = vsel %vm313, %v2435, %v2436
        %v2442 = vsel %vm313, %v2433, -1e+30
        %v2443 = vsel %vm313, %v2436, -1e+30
        %vm2444 = vcmask 1040384
        %v2445 = vrot.slane %v2424, 7
        %v2446 = vrot.slane %v2425, 7
        %v2447 = vsel %vm2444, %v2445, %v2446
        %v2448 = vrot.slane %v2426, 7
        %v2449 = vrot.slane %v2427, 7
        %v2450 = vsel %vm2444, %v2448, %v2449
        %v2455 = vsel %vm2444, -1e+30, %v2445
        %v2456 = vsel %vm2444, -1e+30, %v2448
        %v2457 = vlaneseq
        %v2458 = vshrl.u32 %v2457, 7
        %v2459 = vadd.s32 %v2458, 8
        %vm2460 = vcmp.lt.s32.totalorder %v2458, 14
        %vm2461 = vcmp.lt.s32.totalorder %v2459, 14
        %v2462 = vsel %vm2460, 1, 0
        %v2463 = vsel %vm2461, 1, 0
        %vm2464 = vcmp.eq.s32.totalorder %v2462, 1
        %vm2465 = vcmp.eq.s32.totalorder %v2463, 1
        %v2466 = vsel %vm2464, %v2434, -1e+30
        %v2467 = vsel %vm2465, %v2442, -1e+30
        %v2468 = vsel %vm2464, %v2437, -1e+30
        %v2469 = vsel %vm2465, %v2443, -1e+30
        %v2470 = vmax.f32 %v2466, %v2455
        %v2471 = vmax.f32 %v2467, %v2447
        %v2472 = vmax.f32 %v2468, %v2456
        %v2473 = vmax.f32 %v2469, %v2450
        %v2474 = vmax.f32 %v2424, %v2470
        %v2475 = vmax.f32 %v2425, %v2471
        %v2476 = vmax.f32 %v2426, %v2472
        %v2477 = vmax.f32 %v2427, %v2473
        %v2478 = vld [vmem:[%s6] sm:$0xff]
        %v2479 = vld [vmem:[%s6 + $0x8] sm:$0x7f]
        %v2481 = vsel %vm423, %v2474, 0
        %v2484 = vsel %vm423, %v2475, 0
        %v2487 = vsel %vm423, %v2476, 0
        %v2490 = vsel %vm423, %v2477, 0
        %v2493 = vsel %vm313, %v2479, 0
        %2495 = vmatprep.subr.mxu0 0.0
        %2496 = vmatpush1.msra.mxu0 %v2478
        %2497 = vmatprep.subr.mxu0 0.0
        %2498 = vmatpush1.msra.mxu0 %v2493
        %2499 = vmatprep.subr.mxu0 0.0
        %2500 = vmatpush1.msra.mxu0 0.0
        %2501 = vmatprep.subr.mxu0 0.0
        %2502 = vmatpush1.msra.mxu0 0.0
        %2503 = vmatprep.subr.mxu0 0.0
        %2504 = vmatpush1.msra.mxu0 0.0
        %2505 = vmatprep.subr.mxu0 0.0
        %2506 = vmatpush1.msra.mxu0 0.0
        %2507 = vmatprep.subr.mxu0 0.0
        %2508 = vmatpush1.msra.mxu0 0.0
        %2509 = vmatprep.subr.mxu0 0.0
        %2510 = vmatpush1.msra.mxu0 0.0
        %2511 = vmatprep.subr.mxu0 0.0
        %2512 = vmatpush1.msra.mxu0 0.0
        %2513 = vmatprep.subr.mxu0 0.0
        %2514 = vmatpush1.msra.mxu0 0.0
        %2515 = vmatprep.subr.mxu0 0.0
        %2516 = vmatpush1.msra.mxu0 0.0
        %2517 = vmatprep.subr.mxu0 0.0
        %2518 = vmatpush1.msra.mxu0 0.0
        %2519 = vmatprep.subr.mxu0 0.0
        %2520 = vmatpush1.msra.mxu0 0.0
        %2521 = vmatprep.subr.mxu0 0.0
        %2522 = vmatpush1.msra.mxu0 0.0
        %2523 = vmatprep.subr.mxu0 0.0
        %2524 = vmatpush1.msra.mxu0 0.0
        %2525 = vmatprep.subr.mxu0 0.0
        %2526 = vmatpush1.msra.mxu0 0.0
        %2527 = vmatprep.subr.mxu0 0.0
        %2528 = vmatpush1.msra.mxu0 0.0
        %2529 = vmatprep.subr.mxu0 0.0
        %2530 = vmatpush1.msra.mxu0 0.0
        %2531 = vmatprep.subr.mxu0 0.0
        %2532 = vmatpush1.msra.mxu0 0.0
        %2533 = vmatprep.subr.mxu0 0.0
        %2534 = vmatpush1.msra.mxu0 0.0
        %2535 = vmatprep.subr.mxu0 0.0
        %2536 = vmatpush1.msra.mxu0 0.0
        %2537 = vmatprep.subr.mxu0 0.0
        %2538 = vmatpush1.msra.mxu0 0.0
        %2539 = vmatprep.subr.mxu0 0.0
        %2540 = vmatpush1.msra.mxu0 0.0
        %2541 = vmatprep.subr.mxu0 0.0
        %2542 = vmatpush1.msra.mxu0 0.0
        %2543 = vmatprep.subr.mxu0 0.0
        %2544 = vmatpush1.msra.mxu0 0.0
        %2545 = vmatprep.subr.mxu0 0.0
        %2546 = vmatpush1.msra.mxu0 0.0
        %2547 = vmatprep.subr.mxu0 0.0
        %2548 = vmatpush1.msra.mxu0 0.0
        %2549 = vmatprep.subr.mxu0 0.0
        %2550 = vmatpush1.msra.mxu0 0.0
        %2551 = vmatprep.subr.mxu0 0.0
        %2552 = vmatpush1.msra.mxu0 0.0
        %2553 = vmatprep.subr.mxu0 0.0
        %2554 = vmatpush1.msra.mxu0 0.0
        %2555 = vmatprep.subr.mxu0 0.0
        %2556 = vmatpush1.msra.mxu0 0.0
        %2557 = vmatprep.subr.mxu0 0.0
        %2558 = vmatpush1.msra.mxu0 0.0
        %2559 = vmatprep.mubr.f32.mxu0 0.0
        %2560 = vmatmul.mubr.f32.gmra.mrb[0].mxu0 %v2481
        %v2561 = vpop.f32.mrb[0].mxu0
        %v2562 = vadd.f32 0.0, %v2561
        %v2563 = vpop.f32.mrb[0].mxu0
        %2564 = vmatprep.mubr.f32.mxu0 0.0
        %2565 = vmatmul.mubr.f32.gmra.mrb[0].mxu0 %v2484
        %v2566 = vpop.f32.mrb[0].mxu0
        %v2567 = vadd.f32 0.0, %v2566
        %v2568 = vpop.f32.mrb[0].mxu0
        %2569 = vmatprep.mubr.f32.mxu0 0.0
        %2570 = vmatmul.mubr.f32.gmra.mrb[0].mxu0 %v2487
        %v2571 = vpop.f32.mrb[0].mxu0
        %v2572 = vadd.f32 0.0, %v2571
        %v2573 = vpop.f32.mrb[0].mxu0
        %2574 = vmatprep.mubr.f32.mxu0 0.0
        %2575 = vmatmul.mubr.f32.gmra.mrb[0].mxu0 %v2490
        %v2576 = vpop.f32.mrb[0].mxu0
        %v2577 = vadd.f32 0.0, %v2576
        %v2578 = vpop.f32.mrb[0].mxu0
        %2579 = vdwg.mxu0
        %2580 = vst.msk [vmem:[#allocation2 + $0x8] sm:$0xff] %vm418, %v2562
        %2581 = vst.msk [vmem:[#allocation2 + $0x10] sm:$0xff] %vm418, %v2567
        %2582 = vst.msk [vmem:[#allocation2 + $0x20] sm:$0xff] %vm418, %v2572
        %2583 = vst.msk [vmem:[#allocation2 + $0x28] sm:$0xff] %vm418, %v2577
        %v2584 = vld [vmem:[%s640] ss:$2 sm:$0xff]
        %v2585 = vld [vmem:[%s642] ss:$2 sm:$0xff]
        %v2586 = vld [vmem:[%s3] sm:$0xf]
        %v2587 = vcombine.high %v2584, 0.0
        %v2589 = vunpack.c.l.s4 1983009808
        %v2590 = vunpack.c.0.s8 %v2589
        %v2591 = vlaneseq
        %v2592 = vshrl.u32 %v2591, 7
        %v2593 = vsub.s32 %v2590, %v2592
        %v2594 = vrot.slane %v2584, %v2593
        %v2596 = vunpack.c.l.s4 1983009808
        %v2597 = vunpack.c.0.s8 %v2596
        %v2598 = vlaneseq
        %v2599 = vshrl.u32 %v2598, 7
        %v2600 = vsub.s32 %v2597, %v2599
        %v2601 = vrot.slane %v2587, %v2600
        %v2602 = vcombine.high %v2585, 0.0
        %v2604 = vunpack.c.l.s4 1983009808
        %v2605 = vunpack.c.0.s8 %v2604
        %v2606 = vlaneseq
        %v2607 = vshrl.u32 %v2606, 7
        %v2608 = vsub.s32 %v2605, %v2607
        %v2609 = vrot.slane %v2585, %v2608
        %v2611 = vunpack.c.l.s4 1983009808
        %v2612 = vunpack.c.0.s8 %v2611
        %v2613 = vlaneseq
        %v2614 = vshrl.u32 %v2613, 7
        %v2615 = vsub.s32 %v2612, %v2614
        %v2616 = vrot.slane %v2602, %v2615
        %v2617 = vcombine.low %v2594, %v2609
        %v2618 = vcombine.high %v2594, %v2609
        %v2620 = vunpack.c.l.s4 1934713408
        %v2621 = vunpack.c.0.s8 %v2620
        %v2622 = vlaneseq
        %v2623 = vshrl.u32 %v2622, 7
        %v2624 = vsub.s32 %v2621, %v2623
        %v2625 = vrot.slane %v2617, %v2624
        %v2627 = vunpack.c.l.s4 1934713408
        %v2628 = vunpack.c.0.s8 %v2627
        %v2629 = vlaneseq
        %v2630 = vshrl.u32 %v2629, 7
        %v2631 = vsub.s32 %v2628, %v2630
        %v2632 = vrot.slane %v2618, %v2631
        %v2633 = vcombine.low %v2601, %v2616
        %v2634 = vcombine.high %v2601, %v2616
        %v2636 = vunpack.c.l.s4 1934713408
        %v2637 = vunpack.c.0.s8 %v2636
        %v2638 = vlaneseq
        %v2639 = vshrl.u32 %v2638, 7
        %v2640 = vsub.s32 %v2637, %v2639
        %v2641 = vrot.slane %v2633, %v2640
        %v2643 = vunpack.c.l.s4 1934713408
        %v2644 = vunpack.c.0.s8 %v2643
        %v2645 = vlaneseq
        %v2646 = vshrl.u32 %v2645, 7
        %v2647 = vsub.s32 %v2644, %v2646
        %v2648 = vrot.slane %v2634, %v2647
        %v2649 = vcombine.high %v2625, 0.0
        %v2650 = vcombine.high %v2632, 0.0
        %v2651 = vcombine.high %v2641, 0.0
        %v2652 = vcombine.high %v2648, 0.0
        %2654 = vrot.lane.b32.xlu0 %v2649, 8
        %v2655 = vpop.permute.xlu0 %2654
        %2658 = vrot.lane.b32.xlu0 %v2632, 16
        %v2659 = vpop.permute.xlu0 %2658
        %2662 = vrot.lane.b32.xlu0 %v2650, 24
        %v2663 = vpop.permute.xlu0 %2662
        %2666 = vrot.lane.b32.xlu0 %v2641, 32
        %v2667 = vpop.permute.xlu0 %2666
        %2670 = vrot.lane.b32.xlu0 %v2651, 40
        %v2671 = vpop.permute.xlu0 %2670
        %2674 = vrot.lane.b32.xlu0 %v2648, 48
        %v2675 = vpop.permute.xlu0 %2674
        %2678 = vrot.lane.b32.xlu0 %v2652, 56
        %v2679 = vpop.permute.xlu0 %2678
        %v2681 = vsel %vm418, %v2625, %v2655
        %v2682 = vsel %vm628, %v2681, %v2659
        %v2683 = vsel %vm630, %v2682, %v2663
        %v2684 = vsel %vm632, %v2683, %v2667
        %v2685 = vsel %vm634, %v2684, %v2671
        %v2686 = vsel %vm636, %v2685, %v2675
        %v2687 = vsel %vm638, %v2686, %v2679
        %v2688 = vld [vmem:[%s4] sm:$0xf]
        %2690 = vset.pattern.permute.xlu0 0
        %2691 = vperm.xlu0 %2690, %v2688
        %v2692 = vpop.permute.xlu0 %2691
        %v2695 = vsel %vm747, %v2586, 0
        %v2698 = vsel %vm751, %v2687, 0
        %2700 = vmatprep.subr.mxu0 0.0
        %2701 = vmatpush1.msra.mxu0 %v2698
        %2702 = vmatprep.subr.mxu0 0.0
        %2703 = vmatpush1.msra.mxu0 0.0
        %2704 = vmatprep.subr.mxu0 0.0
        %2705 = vmatpush1.msra.mxu0 0.0
        %2706 = vmatprep.subr.mxu0 0.0
        %2707 = vmatpush1.msra.mxu0 0.0
        %2708 = vmatprep.subr.mxu0 0.0
        %2709 = vmatpush1.msra.mxu0 0.0
        %2710 = vmatprep.subr.mxu0 0.0
        %2711 = vmatpush1.msra.mxu0 0.0
        %2712 = vmatprep.subr.mxu0 0.0
        %2713 = vmatpush1.msra.mxu0 0.0
        %2714 = vmatprep.subr.mxu0 0.0
        %2715 = vmatpush1.msra.mxu0 0.0
        %2716 = vmatprep.subr.mxu0 0.0
        %2717 = vmatpush1.msra.mxu0 0.0
        %2718 = vmatprep.subr.mxu0 0.0
        %2719 = vmatpush1.msra.mxu0 0.0
        %2720 = vmatprep.subr.mxu0 0.0
        %2721 = vmatpush1.msra.mxu0 0.0
        %2722 = vmatprep.subr.mxu0 0.0
        %2723 = vmatpush1.msra.mxu0 0.0
        %2724 = vmatprep.subr.mxu0 0.0
        %2725 = vmatpush1.msra.mxu0 0.0
        %2726 = vmatprep.subr.mxu0 0.0
        %2727 = vmatpush1.msra.mxu0 0.0
        %2728 = vmatprep.subr.mxu0 0.0
        %2729 = vmatpush1.msra.mxu0 0.0
        %2730 = vmatprep.subr.mxu0 0.0
        %2731 = vmatpush1.msra.mxu0 0.0
        %2732 = vmatprep.subr.mxu0 0.0
        %2733 = vmatpush1.msra.mxu0 0.0
        %2734 = vmatprep.subr.mxu0 0.0
        %2735 = vmatpush1.msra.mxu0 0.0
        %2736 = vmatprep.subr.mxu0 0.0
        %2737 = vmatpush1.msra.mxu0 0.0
        %2738 = vmatprep.subr.mxu0 0.0
        %2739 = vmatpush1.msra.mxu0 0.0
        %2740 = vmatprep.subr.mxu0 0.0
        %2741 = vmatpush1.msra.mxu0 0.0
        %2742 = vmatprep.subr.mxu0 0.0
        %2743 = vmatpush1.msra.mxu0 0.0
        %2744 = vmatprep.subr.mxu0 0.0
        %2745 = vmatpush1.msra.mxu0 0.0
        %2746 = vmatprep.subr.mxu0 0.0
        %2747 = vmatpush1.msra.mxu0 0.0
        %2748 = vmatprep.subr.mxu0 0.0
        %2749 = vmatpush1.msra.mxu0 0.0
        %2750 = vmatprep.subr.mxu0 0.0
        %2751 = vmatpush1.msra.mxu0 0.0
        %2752 = vmatprep.subr.mxu0 0.0
        %2753 = vmatpush1.msra.mxu0 0.0
        %2754 = vmatprep.subr.mxu0 0.0
        %2755 = vmatpush1.msra.mxu0 0.0
        %2756 = vmatprep.subr.mxu0 0.0
        %2757 = vmatpush1.msra.mxu0 0.0
        %2758 = vmatprep.subr.mxu0 0.0
        %2759 = vmatpush1.msra.mxu0 0.0
        %2760 = vmatprep.subr.mxu0 0.0
        %2761 = vmatpush1.msra.mxu0 0.0
        %2762 = vmatprep.subr.mxu0 0.0
        %2763 = vmatpush1.msra.mxu0 0.0
        %2764 = vmatprep.mubr.f32.mxu0 0.0
        %2765 = vmatmul.mubr.f32.gmra.mrb[0].mxu0 %v2695
        %v2766 = vpop.f32.mrb[0].mxu0
        %v2767 = vadd.f32 %v2692, %v2766
        %v2768 = vpop.f32.mrb[0].mxu0
        %2769 = vdwg.mxu0
        %v2770 = vsub.f32 0.0, %v2767
        %v2771 = vmul.f32 %v2770, 1.442695
        %v2772 = vpow.pop %v2771
        %v2773 = vadd.f32 %v2772, 1.0
        %v2774 = vrcp.pop %v2773
        %v2775 = vmul.f32 %v2767, %v2774
        %2776 = vst.msk [vmem:[%s296 + $0x4] sm:$0xf] %vm2380, %v2775
        %s2777 = sand.u32 %s184, 1
        %s2778 = scalar_lea.sflag [#allocation5], %s2777
        %s2779 = sand.u32 %s184, 1
        %s2780 = smul.addr %s2779, 8
        %s2781 = scalar_lea.vmem [#allocation6], %s2780
        // Predicated region
        $region53: #{tpu_custom_call.1} parent=47 // pred_check
          %p2782 = pneg %p194
        $region54: #{tpu_custom_call.1} parent=47 // pred_check_branch
          %2784 = sbr.rel (%p2782) target = $region56
        $region55: #{tpu_custom_call.1} parent=47 // pred_region
          %s2786 = ssub.s32 128, 128
          %2787 = vsyncadd %s2778, %s2786
          %s2788 = smul.addr %s24, 128
          %s2789 = scalar_lea.hbm %s7, %s2788
          %s2791 = sshll.u32 %s2781, 4
          %s2792 = int_to_ptr.vmem [resolvable:$true] %s2791
          %2794 = dma.vmem_to_hbm [thread:$0]  %s2792, 128, %s2789, %s2778
        $region56: #{tpu_custom_call.1} parent=47 // pred_fallthru
          _
      $region48: #{tpu_custom_call.1} parent=5 // pred_fallthru
        _
      %p2795 = scmp.le.s32.totalorder 2, %s19
      // Predicated region
      $region57: #{tpu_custom_call.1} parent=5 // pred_check
        %p2796 = pneg %p2795
      $region58: #{tpu_custom_call.1} parent=5 // pred_check_branch
        %2798 = sbr.rel (%p2796) target = $region60
      $region59: #{tpu_custom_call.1} parent=5 // pred_region
        %s2799 = ssub.s32 %s19, 2
        // Predicated region
        $region61: #{tpu_custom_call.1} parent=59 // pred_check
          %p2800 = pneg %p200
        $region62: #{tpu_custom_call.1} parent=59 // pred_check_branch
          %2802 = sbr.rel (%p2800) target = $region64
        $region63: #{tpu_custom_call.1} parent=59 // pred_region
          %s2803 = sand.u32 %s185, 1
          %s2804 = scalar_lea.sflag [#allocation5], %s2803
          %s2805 = sand.u32 %s185, 1
          %s2806 = smul.addr %s2805, 8
          %s2807 = scalar_lea.vmem [#allocation6], %s2806
          %2808 = dma.done %s2804, 128
        $region64: #{tpu_custom_call.1} parent=59 // pred_fallthru
          _
      $region60: #{tpu_custom_call.1} parent=5 // pred_fallthru
        _
    $region6: #{tpu_custom_call.1} parent=1 // loop_footer
      %s23 = sadd.s32 1, %s19
    $region7: #{tpu_custom_call.1} parent=1 // loop_footer_branch
      %18 = sbr.rel target = $region3
    $region8: #{tpu_custom_call.1} parent=1 // loop_exit
      _
    %2809 = vsyncpa [#allocation4], 1
    %s2810 = scalar_lea.sflag [#allocation4], 1
    %2811 = vsyncpa %s2810, 1
    %2812 = vsyncpa [#allocation5], 1
    %s2813 = scalar_lea.sflag [#allocation5], 1
    %2814 = vsyncpa %s2813, 1

</llo_original>
